<compile_context>
chip_gen: v7x
topology: tpu7x:2x2x1
jax: 0.10.0
libtpu: 0.0.40
codegen_flags: <defaults>
</compile_context>

<pallas_src>
import math

import jax
import jax.numpy as jnp
from jax import lax
from jax.experimental import pallas as pl
from jax.experimental.pallas import tpu as pltpu


def encoder_layer_forward(x, mask, params, *, num_heads, eps=1e-6, tq=None,
                          vmem_limit_bytes=None):
    """Fused Pallas TPU EncoderLayer forward.

    x:    (B, S, D) float32
    mask: (B, 1, S) int (1 = attend, 0 = masked key position)
    """
    B, S, D = x.shape
    H = num_heads
    assert D % H == 0, "d_model must be divisible by num_heads"
    DK = D // H
    F = params["w1"].shape[1]

    if tq is None:
        tq = min(S, 256)          # v5e/v6e: 256-512 ok; v7x (64 MiB VMEM): 128-256
    assert S % tq == 0 and (tq % 8 == 0 or tq == S)
    NQ = S // tq
    inv_sqrt_dk = 1.0 / math.sqrt(DK)

    # ----- wrapper-side packing / casting (fused QKV weight, bf16 weights,
    #       additive mask bias) -----
    wqkv = params["wqkv"]                                  # (3, D, D)
    bqkv = params["bqkv"]                                  # (3, 1, D)
    wqkv_p = jnp.concatenate([wqkv[0], wqkv[1], wqkv[2]], axis=1).astype(jnp.bfloat16)
    bqkv_p = jnp.concatenate([bqkv[0], bqkv[1], bqkv[2]], axis=1).astype(jnp.float32)
    wo = params["wo"].astype(jnp.bfloat16)
    w1 = params["w1"].astype(jnp.bfloat16)
    w2 = params["w2"].astype(jnp.bfloat16)
    bo, bf1, bf2 = params["bo"], params["b1"], params["b2"]
    g1, be1 = params["ln1_gamma"], params["ln1_beta"]
    g2, be2 = params["ln2_gamma"], params["ln2_beta"]
    mask_bias = jnp.where(mask == 0, -1e9, 0.0).astype(jnp.float32)   # (B, 1, S)

    def layer_norm(y, gamma, beta):
        # torch: a_2 * (y - mean) / (std + eps) + b_2, unbiased (N-1) std.
        mean = jnp.mean(y, axis=-1, keepdims=True)
        c = y - mean
        var = jnp.sum(c * c, axis=-1, keepdims=True) * (1.0 / (D - 1))
        inv = pl.reciprocal(jnp.sqrt(var) + eps, approx=True)   # per-row, EUP
        return (c * inv) * gamma + beta

    def kernel(xf_ref, xq_ref, bias_ref,
               wqkv_ref, bqkv_ref, wo_ref, bo_ref,
               g1_ref, be1_ref, w1_ref, b1f_ref, w2_ref, b2f_ref,
               g2_ref, be2_ref, out_ref, ctx_scr):
        xf = xf_ref[...]                       # (S, D)  full slab (keys/values)
        xq = xq_ref[...]                       # (TQ, D) query tile (+ residual)
        bias = bias_ref[...]                   # (1, S)  additive mask bias

        xf_b = xf.astype(jnp.bfloat16)
        xq_b = xq.astype(jnp.bfloat16)

        # ---- fused projections: Q on the tile, K|V as one N=2D matmul ----
        q = jnp.dot(xq_b, wqkv_ref[:, :D],
                    preferred_element_type=jnp.float32) + bqkv_ref[:, :D]
        kv = jnp.dot(xf_b, wqkv_ref[:, D:],
                     preferred_element_type=jnp.float32) + bqkv_ref[:, D:]
        q_b = q.astype(jnp.bfloat16)
        k_b = kv[:, :D].astype(jnp.bfloat16)
        v_b = kv[:, D:].astype(jnp.bfloat16)

        # ---- per-head attention; ctx written head-by-head into VMEM scratch
        #      so only one (TQ,S) score tile is live at a time ----
        for h in range(H):                     # static unroll, H is small
            sl = slice(h * DK, (h + 1) * DK)
            s = lax.dot_general(q_b[:, sl], k_b[:, sl],
                                (((1,), (1,)), ((), ())),
                                preferred_element_type=jnp.float32) * inv_sqrt_dk
            s = s + bias                       # additive mask (broadcast (1,S))
            s = s - jnp.max(s, axis=-1, keepdims=True)
            e = jnp.exp(s)
            p = e * pl.reciprocal(jnp.sum(e, axis=-1, keepdims=True), approx=True)
            ctx_scr[:, sl] = jnp.dot(p.astype(jnp.bfloat16), v_b[:, sl],
                                     preferred_element_type=jnp.float32)

        # ---- single K=D output projection (full-MXU contraction) ----
        attn = jnp.dot(ctx_scr[...].astype(jnp.bfloat16), wo_ref[...],
                       preferred_element_type=jnp.float32) + bo_ref[...]

        # TODO(synk): nn.Dropout treated as identity (eval / p=0); stochastic
        # dropout would use pltpu.prng_seed + pltpu.stateful_bernoulli.
        x1 = xq + layer_norm(attn, g1_ref[...], be1_ref[...])

        # ---- position-wise feed-forward ----
        h1 = jnp.maximum(
            jnp.dot(x1.astype(jnp.bfloat16), w1_ref[...],
                    preferred_element_type=jnp.float32) + b1f_ref[...], 0.0)
        ff = jnp.dot(h1.astype(jnp.bfloat16), w2_ref[...],
                     preferred_element_type=jnp.float32) + b2f_ref[...]

        out_ref[...] = (x1 + layer_norm(ff, g2_ref[...], be2_ref[...])
                        ).astype(out_ref.dtype)

    def resident(arr):
        # Full-extent block with a constant index map -> VMEM-resident across
        # the whole grid (loaded once, never re-DMA'd).
        zeros = (0,) * arr.ndim
        return pl.BlockSpec(arr.shape, lambda b, qi: zeros)

    cp_kwargs = dict(dimension_semantics=("parallel", "parallel"))
    if vmem_limit_bytes is not None:
        cp_kwargs["vmem_limit_bytes"] = vmem_limit_bytes

    out = pl.pallas_call(
        kernel,
        out_shape=jax.ShapeDtypeStruct((B, S, D), x.dtype),
        grid_spec=pltpu.PrefetchScalarGridSpec(
            num_scalar_prefetch=0,
            grid=(B, NQ),
            in_specs=[
                pl.BlockSpec((None, S, D), lambda b, qi: (b, 0, 0)),    # x full slab (K/V)
                pl.BlockSpec((None, tq, D), lambda b, qi: (b, qi, 0)),  # x query tile
                pl.BlockSpec((None, 1, S), lambda b, qi: (b, 0, 0)),    # additive mask bias
                resident(wqkv_p), resident(bqkv_p),
                resident(wo), resident(bo),
                resident(g1), resident(be1),
                resident(w1), resident(bf1),
                resident(w2), resident(bf2),
                resident(g2), resident(be2),
            ],
            out_specs=pl.BlockSpec((None, tq, D), lambda b, qi: (b, qi, 0)),
            scratch_shapes=[pltpu.VMEM((tq, D), jnp.float32)],          # per-head ctx slab
        ),
        compiler_params=pltpu.CompilerParams(**cp_kwargs),
    )(x, x, mask_bias, wqkv_p, bqkv_p, wo, bo, g1, be1, w1, bf1, w2, bf2, g2, be2)

    return out


# ----------------------------- pure-JAX reference -----------------------------
def _ref_layer_norm(y, gamma, beta, eps=1e-6):
    mean = y.mean(-1, keepdims=True)
    c = y - mean
    var = (c * c).sum(-1, keepdims=True) / (y.shape[-1] - 1)   # unbiased, like torch
    return gamma * c / (jnp.sqrt(var) + eps) + beta


def _ref_encoder_layer(x, mask, params, num_heads, eps=1e-6, mm_dtype=jnp.float32):
    """Module reference. mm_dtype=bf16 mirrors the kernel's MXU precision."""
    B, S, D = x.shape
    H = num_heads
    DK = D // H
    c = lambda t: t.astype(mm_dtype)

    wqkv, bqkv = params["wqkv"], params["bqkv"]
    q = jnp.einsum("bsd,de->bse", c(x), c(wqkv[0]),
                   preferred_element_type=jnp.float32) + bqkv[0]
    k = jnp.einsum("bsd,de->bse", c(x), c(wqkv[1]),
                   preferred_element_type=jnp.float32) + bqkv[1]
    v = jnp.einsum("bsd,de->bse", c(x), c(wqkv[2]),
                   preferred_element_type=jnp.float32) + bqkv[2]

    def split(t):
        return t.reshape(B, S, H, DK).transpose(0, 2, 1, 3)

    qh, kh, vh = split(q), split(k), split(v)
    scores = jnp.einsum("bhqd,bhkd->bhqk", c(qh), c(kh),
                        preferred_element_type=jnp.float32) / math.sqrt(DK)
    scores = jnp.where(mask[:, None, :, :] == 0, -1e9, scores)
    p = jax.nn.softmax(scores, axis=-1)
    ctx = jnp.einsum("bhqk,bhkd->bhqd", c(p), c(vh),
                     preferred_element_type=jnp.float32)
    ctx = ctx.transpose(0, 2, 1, 3).reshape(B, S, D)
    attn = jnp.einsum("bsd,de->bse", c(ctx), c(params["wo"]),
                      preferred_element_type=jnp.float32) + params["bo"]
    x1 = x + _ref_layer_norm(attn, params["ln1_gamma"], params["ln1_beta"], eps)
    h = jnp.maximum(jnp.einsum("bsd,df->bsf", c(x1), c(params["w1"]),
                               preferred_element_type=jnp.float32) + params["b1"], 0.0)
    ff = jnp.einsum("bsf,fd->bsd", c(h), c(params["w2"]),
                    preferred_element_type=jnp.float32) + params["b2"]
    return x1 + _ref_layer_norm(ff, params["ln2_gamma"], params["ln2_beta"], eps)


if __name__ == "__main__":
    # Small deterministic setup: batch=2, seq=8, d_model=32, heads=4, d_ff=64.
    B, S, D, H, F = 2, 8, 32, 4, 64

    ks = jax.random.split(jax.random.PRNGKey(0), 13)
    params = {
        "wqkv": jax.random.normal(ks[0], (3, D, D), jnp.float32) / math.sqrt(D),
        "bqkv": jax.random.normal(ks[1], (3, 1, D), jnp.float32) * 0.1,
        "wo": jax.random.normal(ks[2], (D, D), jnp.float32) / math.sqrt(D),
        "bo": jax.random.normal(ks[3], (1, D), jnp.float32) * 0.1,
        "ln1_gamma": 1.0 + 0.1 * jax.random.normal(ks[4], (1, D), jnp.float32),
        "ln1_beta": 0.1 * jax.random.normal(ks[5], (1, D), jnp.float32),
        "w1": jax.random.normal(ks[6], (D, F), jnp.float32) / math.sqrt(D),
        "b1": jax.random.normal(ks[7], (1, F), jnp.float32) * 0.1,
        "w2": jax.random.normal(ks[8], (F, D), jnp.float32) / math.sqrt(F),
        "b2": jax.random.normal(ks[9], (1, D), jnp.float32) * 0.1,
        "ln2_gamma": 1.0 + 0.1 * jax.random.normal(ks[10], (1, D), jnp.float32),
        "ln2_beta": 0.1 * jax.random.normal(ks[11], (1, D), jnp.float32),
    }
    x = jax.random.normal(ks[12], (B, S, D), jnp.float32)
    mask = jnp.ones((B, 1, S), jnp.int32)
    mask = mask.at[1, 0, S - 2:].set(0)   # mask last two key positions of batch 1

    out = encoder_layer_forward(x, mask, params, num_heads=H)
    out = jax.block_until_ready(out)
    assert out.shape == (B, S, D) and out.dtype == jnp.float32

    # Primary check: reference with matched (bf16) matmul precision.
    ref_bf16 = _ref_encoder_layer(x, mask, params, num_heads=H, mm_dtype=jnp.bfloat16)
    assert jnp.allclose(out, ref_bf16, atol=3e-2, rtol=3e-2), (
        float(jnp.max(jnp.abs(out - ref_bf16))))

    # Sanity envelope vs. the full-f32 module semantics (bf16 MXU + approx
    # reciprocals make a tight f32 comparison inappropriate; see perf review).
    ref_f32 = _ref_encoder_layer(x, mask, params, num_heads=H, mm_dtype=jnp.float32)
    assert jnp.allclose(out, ref_f32, atol=0.25, rtol=0.05), (
        float(jnp.max(jnp.abs(out - ref_f32))))

    print("KERNEL_OK")
</pallas_src>

<mosaic_0001>
module attributes {stable_mosaic.version = 11 : i64} {
  func.func @kernel(%arg0: i32, %arg1: i32, %arg2: memref<1x8x32xf32, #tpu.memory_space<vmem>>, %arg3: memref<1x8x32xf32, #tpu.memory_space<vmem>>, %arg4: memref<1x1x8xf32, #tpu.memory_space<vmem>>, %arg5: memref<32x96xbf16, #tpu.memory_space<vmem>>, %arg6: memref<1x96xf32, #tpu.memory_space<vmem>>, %arg7: memref<32x32xbf16, #tpu.memory_space<vmem>>, %arg8: memref<1x32xf32, #tpu.memory_space<vmem>>, %arg9: memref<1x32xf32, #tpu.memory_space<vmem>>, %arg10: memref<1x32xf32, #tpu.memory_space<vmem>>, %arg11: memref<32x64xbf16, #tpu.memory_space<vmem>>, %arg12: memref<1x64xf32, #tpu.memory_space<vmem>>, %arg13: memref<64x32xbf16, #tpu.memory_space<vmem>>, %arg14: memref<1x32xf32, #tpu.memory_space<vmem>>, %arg15: memref<1x32xf32, #tpu.memory_space<vmem>>, %arg16: memref<1x32xf32, #tpu.memory_space<vmem>>, %arg17: memref<1x8x32xf32, #tpu.memory_space<vmem>>, %arg18: memref<8x32xf32, #tpu.memory_space<vmem>>) attributes {dimension_semantics = [#tpu.dimension_semantics<parallel>, #tpu.dimension_semantics<parallel>], iteration_bounds = array<i64: 2, 1>, scalar_prefetch = 0 : i64, scratch_operands = 1 : i64, tpu.core_type = #tpu.core_type<tc>, window_params = [{transform_indices = @transform_0, window_bounds = array<i64: 1, 8, 32>}, {transform_indices = @transform_1, window_bounds = array<i64: 1, 8, 32>}, {transform_indices = @transform_2, window_bounds = array<i64: 1, 1, 8>}, {pipeline_mode = #tpu.pipeline_mode<synchronous>, transform_indices = @transform_3, window_bounds = array<i64: 32, 96>}, {pipeline_mode = #tpu.pipeline_mode<synchronous>, transform_indices = @transform_4, window_bounds = array<i64: 1, 96>}, {pipeline_mode = #tpu.pipeline_mode<synchronous>, transform_indices = @transform_5, window_bounds = array<i64: 32, 32>}, {pipeline_mode = #tpu.pipeline_mode<synchronous>, transform_indices = @transform_6, window_bounds = array<i64: 1, 32>}, {pipeline_mode = #tpu.pipeline_mode<synchronous>, transform_indices = @transform_7, window_bounds = array<i64: 1, 32>}, {pipeline_mode = #tpu.pipeline_mode<synchronous>, transform_indices = @transform_8, window_bounds = array<i64: 1, 32>}, {pipeline_mode = #tpu.pipeline_mode<synchronous>, transform_indices = @transform_9, window_bounds = array<i64: 32, 64>}, {pipeline_mode = #tpu.pipeline_mode<synchronous>, transform_indices = @transform_10, window_bounds = array<i64: 1, 64>}, {pipeline_mode = #tpu.pipeline_mode<synchronous>, transform_indices = @transform_11, window_bounds = array<i64: 64, 32>}, {pipeline_mode = #tpu.pipeline_mode<synchronous>, transform_indices = @transform_12, window_bounds = array<i64: 1, 32>}, {pipeline_mode = #tpu.pipeline_mode<synchronous>, transform_indices = @transform_13, window_bounds = array<i64: 1, 32>}, {pipeline_mode = #tpu.pipeline_mode<synchronous>, transform_indices = @transform_14, window_bounds = array<i64: 1, 32>}, {transform_indices = @transform_15, window_bounds = array<i64: 1, 8, 32>}]} {
    %c0 = arith.constant 0 : index
    %c0_0 = arith.constant 0 : index
    %c0_1 = arith.constant 0 : index
    %0 = vector.load %arg2[%c0, %c0_0, %c0_1] : memref<1x8x32xf32, #tpu.memory_space<vmem>>, vector<1x8x32xf32>
    %1 = vector.shape_cast %0 : vector<1x8x32xf32> to vector<8x32xf32>
    %c0_2 = arith.constant 0 : index
    %c0_3 = arith.constant 0 : index
    %c0_4 = arith.constant 0 : index
    %2 = vector.load %arg3[%c0_2, %c0_3, %c0_4] : memref<1x8x32xf32, #tpu.memory_space<vmem>>, vector<1x8x32xf32>
    %3 = vector.shape_cast %2 : vector<1x8x32xf32> to vector<8x32xf32>
    %c0_5 = arith.constant 0 : index
    %c0_6 = arith.constant 0 : index
    %c0_7 = arith.constant 0 : index
    %4 = vector.load %arg4[%c0_5, %c0_6, %c0_7] : memref<1x1x8xf32, #tpu.memory_space<vmem>>, vector<1x1x8xf32>
    %5 = vector.shape_cast %4 : vector<1x1x8xf32> to vector<1x8xf32>
    %6 = arith.truncf %1 : vector<8x32xf32> to vector<8x32xbf16>
    %7 = arith.truncf %3 : vector<8x32xf32> to vector<8x32xbf16>
    %c0_8 = arith.constant 0 : index
    %c0_9 = arith.constant 0 : index
    %8 = vector.load %arg5[%c0_8, %c0_9] : memref<32x96xbf16, #tpu.memory_space<vmem>>, vector<32x32xbf16>
    %cst = arith.constant dense<0.000000e+00> : vector<8x32xf32>
    %9 = tpu.matmul %7, %8, %cst {dimension_numbers = #tpu.dot_dimension_numbers<[1], [0], [0], [1], [0, 0, 1, 1], [], []>} : vector<8x32xbf16>, vector<32x32xbf16>, vector<8x32xf32> -> vector<8x32xf32>
    %c0_10 = arith.constant 0 : index
    %c0_11 = arith.constant 0 : index
    %10 = vector.load %arg6[%c0_10, %c0_11] : memref<1x96xf32, #tpu.memory_space<vmem>>, vector<1x32xf32>
    %11 = vector.broadcast %10 : vector<1x32xf32> to vector<8x32xf32>
    %12 = arith.addf %9, %11 : vector<8x32xf32>
    %c0_12 = arith.constant 0 : index
    %c32 = arith.constant 32 : index
    %13 = vector.load %arg5[%c0_12, %c32] : memref<32x96xbf16, #tpu.memory_space<vmem>>, vector<32x64xbf16>
    %cst_13 = arith.constant dense<0.000000e+00> : vector<8x64xf32>
    %14 = tpu.matmul %6, %13, %cst_13 {dimension_numbers = #tpu.dot_dimension_numbers<[1], [0], [0], [1], [0, 0, 1, 1], [], []>} : vector<8x32xbf16>, vector<32x64xbf16>, vector<8x64xf32> -> vector<8x64xf32>
    %c0_14 = arith.constant 0 : index
    %c32_15 = arith.constant 32 : index
    %15 = vector.load %arg6[%c0_14, %c32_15] : memref<1x96xf32, #tpu.memory_space<vmem>>, vector<1x64xf32>
    %16 = vector.broadcast %15 : vector<1x64xf32> to vector<8x64xf32>
    %17 = arith.addf %14, %16 : vector<8x64xf32>
    %18 = arith.truncf %12 : vector<8x32xf32> to vector<8x32xbf16>
    %19 = vector.extract_strided_slice %17 {offsets = [0, 0], sizes = [8, 32], strides = [1, 1]} : vector<8x64xf32> to vector<8x32xf32>
    %20 = arith.truncf %19 : vector<8x32xf32> to vector<8x32xbf16>
    %21 = vector.extract_strided_slice %17 {offsets = [0, 32], sizes = [8, 32], strides = [1, 1]} : vector<8x64xf32> to vector<8x32xf32>
    %22 = arith.truncf %21 : vector<8x32xf32> to vector<8x32xbf16>
    %23 = vector.extract_strided_slice %18 {offsets = [0, 0], sizes = [8, 8], strides = [1, 1]} : vector<8x32xbf16> to vector<8x8xbf16>
    %24 = vector.extract_strided_slice %20 {offsets = [0, 0], sizes = [8, 8], strides = [1, 1]} : vector<8x32xbf16> to vector<8x8xbf16>
    %cst_16 = arith.constant dense<0.000000e+00> : vector<8x8xf32>
    %25 = tpu.matmul %23, %24, %cst_16 {dimension_numbers = #tpu.dot_dimension_numbers<[1], [1], [0], [0], [0, 0, 1, 0], [], []>} : vector<8x8xbf16>, vector<8x8xbf16>, vector<8x8xf32> -> vector<8x8xf32>
    %cst_17 = arith.constant 0.353553385 : f32
    %26 = vector.broadcast %cst_17 : f32 to vector<8x8xf32>
    %27 = arith.mulf %25, %26 : vector<8x8xf32>
    %28 = vector.broadcast %5 : vector<1x8xf32> to vector<8x8xf32>
    %29 = arith.addf %27, %28 : vector<8x8xf32>
    %cst_18 = arith.constant dense<0xFF800000> : vector<8xf32>
    %30 = vector.multi_reduction <maximumf>, %29, %cst_18 [1] : vector<8x8xf32> to vector<8xf32>
    %31 = vector.shape_cast %30 : vector<8xf32> to vector<8x1xf32>
    %32 = vector.broadcast %31 : vector<8x1xf32> to vector<8x8xf32>
    %33 = arith.subf %29, %32 : vector<8x8xf32>
    %34 = math.exp %33 : vector<8x8xf32>
    %cst_19 = arith.constant dense<0.000000e+00> : vector<8xf32>
    %35 = vector.multi_reduction <add>, %34, %cst_19 [1] : vector<8x8xf32> to vector<8xf32>
    %36 = vector.shape_cast %35 : vector<8xf32> to vector<8x1xf32>
    %37 = tpu.reciprocal %36 {approx = true} : vector<8x1xf32> -> vector<8x1xf32>
    %38 = vector.broadcast %37 : vector<8x1xf32> to vector<8x8xf32>
    %39 = arith.mulf %34, %38 : vector<8x8xf32>
    %40 = arith.truncf %39 : vector<8x8xf32> to vector<8x8xbf16>
    %41 = vector.extract_strided_slice %22 {offsets = [0, 0], sizes = [8, 8], strides = [1, 1]} : vector<8x32xbf16> to vector<8x8xbf16>
    %cst_20 = arith.constant dense<0.000000e+00> : vector<8x8xf32>
    %42 = tpu.matmul %40, %41, %cst_20 {dimension_numbers = #tpu.dot_dimension_numbers<[1], [0], [0], [1], [0, 0, 1, 1], [], []>} : vector<8x8xbf16>, vector<8x8xbf16>, vector<8x8xf32> -> vector<8x8xf32>
    %c0_21 = arith.constant 0 : index
    %c0_22 = arith.constant 0 : index
    %43 = vector.load %arg18[%c0_21, %c0_22] : memref<8x32xf32, #tpu.memory_space<vmem>>, vector<8x8xf32>
    tpu.vector_store %arg18[%c0_21, %c0_22], %42 {strides = array<i32>} : memref<8x32xf32, #tpu.memory_space<vmem>>, vector<8x8xf32>,
    %44 = vector.extract_strided_slice %18 {offsets = [0, 8], sizes = [8, 8], strides = [1, 1]} : vector<8x32xbf16> to vector<8x8xbf16>
    %45 = vector.extract_strided_slice %20 {offsets = [0, 8], sizes = [8, 8], strides = [1, 1]} : vector<8x32xbf16> to vector<8x8xbf16>
    %cst_23 = arith.constant dense<0.000000e+00> : vector<8x8xf32>
    %46 = tpu.matmul %44, %45, %cst_23 {dimension_numbers = #tpu.dot_dimension_numbers<[1], [1], [0], [0], [0, 0, 1, 0], [], []>} : vector<8x8xbf16>, vector<8x8xbf16>, vector<8x8xf32> -> vector<8x8xf32>
    %cst_24 = arith.constant 0.353553385 : f32
    %47 = vector.broadcast %cst_24 : f32 to vector<8x8xf32>
    %48 = arith.mulf %46, %47 : vector<8x8xf32>
    %49 = vector.broadcast %5 : vector<1x8xf32> to vector<8x8xf32>
    %50 = arith.addf %48, %49 : vector<8x8xf32>
    %cst_25 = arith.constant dense<0xFF800000> : vector<8xf32>
    %51 = vector.multi_reduction <maximumf>, %50, %cst_25 [1] : vector<8x8xf32> to vector<8xf32>
    %52 = vector.shape_cast %51 : vector<8xf32> to vector<8x1xf32>
    %53 = vector.broadcast %52 : vector<8x1xf32> to vector<8x8xf32>
    %54 = arith.subf %50, %53 : vector<8x8xf32>
    %55 = math.exp %54 : vector<8x8xf32>
    %cst_26 = arith.constant dense<0.000000e+00> : vector<8xf32>
    %56 = vector.multi_reduction <add>, %55, %cst_26 [1] : vector<8x8xf32> to vector<8xf32>
    %57 = vector.shape_cast %56 : vector<8xf32> to vector<8x1xf32>
    %58 = tpu.reciprocal %57 {approx = true} : vector<8x1xf32> -> vector<8x1xf32>
    %59 = vector.broadcast %58 : vector<8x1xf32> to vector<8x8xf32>
    %60 = arith.mulf %55, %59 : vector<8x8xf32>
    %61 = arith.truncf %60 : vector<8x8xf32> to vector<8x8xbf16>
    %62 = vector.extract_strided_slice %22 {offsets = [0, 8], sizes = [8, 8], strides = [1, 1]} : vector<8x32xbf16> to vector<8x8xbf16>
    %cst_27 = arith.constant dense<0.000000e+00> : vector<8x8xf32>
    %63 = tpu.matmul %61, %62, %cst_27 {dimension_numbers = #tpu.dot_dimension_numbers<[1], [0], [0], [1], [0, 0, 1, 1], [], []>} : vector<8x8xbf16>, vector<8x8xbf16>, vector<8x8xf32> -> vector<8x8xf32>
    %c0_28 = arith.constant 0 : index
    %c8 = arith.constant 8 : index
    %64 = vector.load %arg18[%c0_28, %c8] : memref<8x32xf32, #tpu.memory_space<vmem>>, vector<8x8xf32>
    tpu.vector_store %arg18[%c0_28, %c8], %63 {strides = array<i32>} : memref<8x32xf32, #tpu.memory_space<vmem>>, vector<8x8xf32>,
    %65 = vector.extract_strided_slice %18 {offsets = [0, 16], sizes = [8, 8], strides = [1, 1]} : vector<8x32xbf16> to vector<8x8xbf16>
    %66 = vector.extract_strided_slice %20 {offsets = [0, 16], sizes = [8, 8], strides = [1, 1]} : vector<8x32xbf16> to vector<8x8xbf16>
    %cst_29 = arith.constant dense<0.000000e+00> : vector<8x8xf32>
    %67 = tpu.matmul %65, %66, %cst_29 {dimension_numbers = #tpu.dot_dimension_numbers<[1], [1], [0], [0], [0, 0, 1, 0], [], []>} : vector<8x8xbf16>, vector<8x8xbf16>, vector<8x8xf32> -> vector<8x8xf32>
    %cst_30 = arith.constant 0.353553385 : f32
    %68 = vector.broadcast %cst_30 : f32 to vector<8x8xf32>
    %69 = arith.mulf %67, %68 : vector<8x8xf32>
    %70 = vector.broadcast %5 : vector<1x8xf32> to vector<8x8xf32>
    %71 = arith.addf %69, %70 : vector<8x8xf32>
    %cst_31 = arith.constant dense<0xFF800000> : vector<8xf32>
    %72 = vector.multi_reduction <maximumf>, %71, %cst_31 [1] : vector<8x8xf32> to vector<8xf32>
    %73 = vector.shape_cast %72 : vector<8xf32> to vector<8x1xf32>
    %74 = vector.broadcast %73 : vector<8x1xf32> to vector<8x8xf32>
    %75 = arith.subf %71, %74 : vector<8x8xf32>
    %76 = math.exp %75 : vector<8x8xf32>
    %cst_32 = arith.constant dense<0.000000e+00> : vector<8xf32>
    %77 = vector.multi_reduction <add>, %76, %cst_32 [1] : vector<8x8xf32> to vector<8xf32>
    %78 = vector.shape_cast %77 : vector<8xf32> to vector<8x1xf32>
    %79 = tpu.reciprocal %78 {approx = true} : vector<8x1xf32> -> vector<8x1xf32>
    %80 = vector.broadcast %79 : vector<8x1xf32> to vector<8x8xf32>
    %81 = arith.mulf %76, %80 : vector<8x8xf32>
    %82 = arith.truncf %81 : vector<8x8xf32> to vector<8x8xbf16>
    %83 = vector.extract_strided_slice %22 {offsets = [0, 16], sizes = [8, 8], strides = [1, 1]} : vector<8x32xbf16> to vector<8x8xbf16>
    %cst_33 = arith.constant dense<0.000000e+00> : vector<8x8xf32>
    %84 = tpu.matmul %82, %83, %cst_33 {dimension_numbers = #tpu.dot_dimension_numbers<[1], [0], [0], [1], [0, 0, 1, 1], [], []>} : vector<8x8xbf16>, vector<8x8xbf16>, vector<8x8xf32> -> vector<8x8xf32>
    %c0_34 = arith.constant 0 : index
    %c16 = arith.constant 16 : index
    %85 = vector.load %arg18[%c0_34, %c16] : memref<8x32xf32, #tpu.memory_space<vmem>>, vector<8x8xf32>
    tpu.vector_store %arg18[%c0_34, %c16], %84 {strides = array<i32>} : memref<8x32xf32, #tpu.memory_space<vmem>>, vector<8x8xf32>,
    %86 = vector.extract_strided_slice %18 {offsets = [0, 24], sizes = [8, 8], strides = [1, 1]} : vector<8x32xbf16> to vector<8x8xbf16>
    %87 = vector.extract_strided_slice %20 {offsets = [0, 24], sizes = [8, 8], strides = [1, 1]} : vector<8x32xbf16> to vector<8x8xbf16>
    %cst_35 = arith.constant dense<0.000000e+00> : vector<8x8xf32>
    %88 = tpu.matmul %86, %87, %cst_35 {dimension_numbers = #tpu.dot_dimension_numbers<[1], [1], [0], [0], [0, 0, 1, 0], [], []>} : vector<8x8xbf16>, vector<8x8xbf16>, vector<8x8xf32> -> vector<8x8xf32>
    %cst_36 = arith.constant 0.353553385 : f32
    %89 = vector.broadcast %cst_36 : f32 to vector<8x8xf32>
    %90 = arith.mulf %88, %89 : vector<8x8xf32>
    %91 = vector.broadcast %5 : vector<1x8xf32> to vector<8x8xf32>
    %92 = arith.addf %90, %91 : vector<8x8xf32>
    %cst_37 = arith.constant dense<0xFF800000> : vector<8xf32>
    %93 = vector.multi_reduction <maximumf>, %92, %cst_37 [1] : vector<8x8xf32> to vector<8xf32>
    %94 = vector.shape_cast %93 : vector<8xf32> to vector<8x1xf32>
    %95 = vector.broadcast %94 : vector<8x1xf32> to vector<8x8xf32>
    %96 = arith.subf %92, %95 : vector<8x8xf32>
    %97 = math.exp %96 : vector<8x8xf32>
    %cst_38 = arith.constant dense<0.000000e+00> : vector<8xf32>
    %98 = vector.multi_reduction <add>, %97, %cst_38 [1] : vector<8x8xf32> to vector<8xf32>
    %99 = vector.shape_cast %98 : vector<8xf32> to vector<8x1xf32>
    %100 = tpu.reciprocal %99 {approx = true} : vector<8x1xf32> -> vector<8x1xf32>
    %101 = vector.broadcast %100 : vector<8x1xf32> to vector<8x8xf32>
    %102 = arith.mulf %97, %101 : vector<8x8xf32>
    %103 = arith.truncf %102 : vector<8x8xf32> to vector<8x8xbf16>
    %104 = vector.extract_strided_slice %22 {offsets = [0, 24], sizes = [8, 8], strides = [1, 1]} : vector<8x32xbf16> to vector<8x8xbf16>
    %cst_39 = arith.constant dense<0.000000e+00> : vector<8x8xf32>
    %105 = tpu.matmul %103, %104, %cst_39 {dimension_numbers = #tpu.dot_dimension_numbers<[1], [0], [0], [1], [0, 0, 1, 1], [], []>} : vector<8x8xbf16>, vector<8x8xbf16>, vector<8x8xf32> -> vector<8x8xf32>
    %c0_40 = arith.constant 0 : index
    %c24 = arith.constant 24 : index
    %106 = vector.load %arg18[%c0_40, %c24] : memref<8x32xf32, #tpu.memory_space<vmem>>, vector<8x8xf32>
    tpu.vector_store %arg18[%c0_40, %c24], %105 {strides = array<i32>} : memref<8x32xf32, #tpu.memory_space<vmem>>, vector<8x8xf32>,
    %c0_41 = arith.constant 0 : index
    %c0_42 = arith.constant 0 : index
    %107 = vector.load %arg18[%c0_41, %c0_42] : memref<8x32xf32, #tpu.memory_space<vmem>>, vector<8x32xf32>
    %108 = arith.truncf %107 : vector<8x32xf32> to vector<8x32xbf16>
    %c0_43 = arith.constant 0 : index
    %c0_44 = arith.constant 0 : index
    %109 = vector.load %arg7[%c0_43, %c0_44] : memref<32x32xbf16, #tpu.memory_space<vmem>>, vector<32x32xbf16>
    %cst_45 = arith.constant dense<0.000000e+00> : vector<8x32xf32>
    %110 = tpu.matmul %108, %109, %cst_45 {dimension_numbers = #tpu.dot_dimension_numbers<[1], [0], [0], [1], [0, 0, 1, 1], [], []>} : vector<8x32xbf16>, vector<32x32xbf16>, vector<8x32xf32> -> vector<8x32xf32>
    %c0_46 = arith.constant 0 : index
    %c0_47 = arith.constant 0 : index
    %111 = vector.load %arg8[%c0_46, %c0_47] : memref<1x32xf32, #tpu.memory_space<vmem>>, vector<1x32xf32>
    %112 = vector.broadcast %111 : vector<1x32xf32> to vector<8x32xf32>
    %113 = arith.addf %110, %112 : vector<8x32xf32>
    %c0_48 = arith.constant 0 : index
    %c0_49 = arith.constant 0 : index
    %114 = vector.load %arg9[%c0_48, %c0_49] : memref<1x32xf32, #tpu.memory_space<vmem>>, vector<1x32xf32>
    %c0_50 = arith.constant 0 : index
    %c0_51 = arith.constant 0 : index
    %115 = vector.load %arg10[%c0_50, %c0_51] : memref<1x32xf32, #tpu.memory_space<vmem>>, vector<1x32xf32>
    %cst_52 = arith.constant dense<0.000000e+00> : vector<8xf32>
    %116 = vector.multi_reduction <add>, %113, %cst_52 [1] : vector<8x32xf32> to vector<8xf32>
    %117 = vector.shape_cast %116 : vector<8xf32> to vector<8x1xf32>
    %cst_53 = arith.constant 3.200000e+01 : f32
    %118 = vector.broadcast %cst_53 : f32 to vector<8x1xf32>
    %119 = arith.divf %117, %118 : vector<8x1xf32>
    %120 = vector.broadcast %119 : vector<8x1xf32> to vector<8x32xf32>
    %121 = arith.subf %113, %120 : vector<8x32xf32>
    %122 = arith.mulf %121, %121 : vector<8x32xf32>
    %cst_54 = arith.constant dense<0.000000e+00> : vector<8xf32>
    %123 = vector.multi_reduction <add>, %122, %cst_54 [1] : vector<8x32xf32> to vector<8xf32>
    %124 = vector.shape_cast %123 : vector<8xf32> to vector<8x1xf32>
    %cst_55 = arith.constant 0.0322580636 : f32
    %125 = vector.broadcast %cst_55 : f32 to vector<8x1xf32>
    %126 = arith.mulf %124, %125 : vector<8x1xf32>
    %127 = math.sqrt %126 : vector<8x1xf32>
    %cst_56 = arith.constant 9.99999997E-7 : f32
    %128 = vector.broadcast %cst_56 : f32 to vector<8x1xf32>
    %129 = arith.addf %127, %128 : vector<8x1xf32>
    %130 = tpu.reciprocal %129 {approx = true} : vector<8x1xf32> -> vector<8x1xf32>
    %131 = vector.broadcast %130 : vector<8x1xf32> to vector<8x32xf32>
    %132 = arith.mulf %121, %131 : vector<8x32xf32>
    %133 = vector.broadcast %114 : vector<1x32xf32> to vector<8x32xf32>
    %134 = arith.mulf %132, %133 : vector<8x32xf32>
    %135 = vector.broadcast %115 : vector<1x32xf32> to vector<8x32xf32>
    %136 = arith.addf %134, %135 : vector<8x32xf32>
    %137 = arith.addf %3, %136 : vector<8x32xf32>
    %138 = arith.truncf %137 : vector<8x32xf32> to vector<8x32xbf16>
    %c0_57 = arith.constant 0 : index
    %c0_58 = arith.constant 0 : index
    %139 = vector.load %arg11[%c0_57, %c0_58] : memref<32x64xbf16, #tpu.memory_space<vmem>>, vector<32x64xbf16>
    %cst_59 = arith.constant dense<0.000000e+00> : vector<8x64xf32>
    %140 = tpu.matmul %138, %139, %cst_59 {dimension_numbers = #tpu.dot_dimension_numbers<[1], [0], [0], [1], [0, 0, 1, 1], [], []>} : vector<8x32xbf16>, vector<32x64xbf16>, vector<8x64xf32> -> vector<8x64xf32>
    %c0_60 = arith.constant 0 : index
    %c0_61 = arith.constant 0 : index
    %141 = vector.load %arg12[%c0_60, %c0_61] : memref<1x64xf32, #tpu.memory_space<vmem>>, vector<1x64xf32>
    %142 = vector.broadcast %141 : vector<1x64xf32> to vector<8x64xf32>
    %143 = arith.addf %140, %142 : vector<8x64xf32>
    %cst_62 = arith.constant 0.000000e+00 : f32
    %144 = vector.broadcast %cst_62 : f32 to vector<8x64xf32>
    %145 = arith.maximumf %143, %144 : vector<8x64xf32>
    %146 = arith.truncf %145 : vector<8x64xf32> to vector<8x64xbf16>
    %c0_63 = arith.constant 0 : index
    %c0_64 = arith.constant 0 : index
    %147 = vector.load %arg13[%c0_63, %c0_64] : memref<64x32xbf16, #tpu.memory_space<vmem>>, vector<64x32xbf16>
    %cst_65 = arith.constant dense<0.000000e+00> : vector<8x32xf32>
    %148 = tpu.matmul %146, %147, %cst_65 {dimension_numbers = #tpu.dot_dimension_numbers<[1], [0], [0], [1], [0, 0, 1, 1], [], []>} : vector<8x64xbf16>, vector<64x32xbf16>, vector<8x32xf32> -> vector<8x32xf32>
    %c0_66 = arith.constant 0 : index
    %c0_67 = arith.constant 0 : index
    %149 = vector.load %arg14[%c0_66, %c0_67] : memref<1x32xf32, #tpu.memory_space<vmem>>, vector<1x32xf32>
    %150 = vector.broadcast %149 : vector<1x32xf32> to vector<8x32xf32>
    %151 = arith.addf %148, %150 : vector<8x32xf32>
    %c0_68 = arith.constant 0 : index
    %c0_69 = arith.constant 0 : index
    %152 = vector.load %arg15[%c0_68, %c0_69] : memref<1x32xf32, #tpu.memory_space<vmem>>, vector<1x32xf32>
    %c0_70 = arith.constant 0 : index
    %c0_71 = arith.constant 0 : index
    %153 = vector.load %arg16[%c0_70, %c0_71] : memref<1x32xf32, #tpu.memory_space<vmem>>, vector<1x32xf32>
    %cst_72 = arith.constant dense<0.000000e+00> : vector<8xf32>
    %154 = vector.multi_reduction <add>, %151, %cst_72 [1] : vector<8x32xf32> to vector<8xf32>
    %155 = vector.shape_cast %154 : vector<8xf32> to vector<8x1xf32>
    %cst_73 = arith.constant 3.200000e+01 : f32
    %156 = vector.broadcast %cst_73 : f32 to vector<8x1xf32>
    %157 = arith.divf %155, %156 : vector<8x1xf32>
    %158 = vector.broadcast %157 : vector<8x1xf32> to vector<8x32xf32>
    %159 = arith.subf %151, %158 : vector<8x32xf32>
    %160 = arith.mulf %159, %159 : vector<8x32xf32>
    %cst_74 = arith.constant dense<0.000000e+00> : vector<8xf32>
    %161 = vector.multi_reduction <add>, %160, %cst_74 [1] : vector<8x32xf32> to vector<8xf32>
    %162 = vector.shape_cast %161 : vector<8xf32> to vector<8x1xf32>
    %cst_75 = arith.constant 0.0322580636 : f32
    %163 = vector.broadcast %cst_75 : f32 to vector<8x1xf32>
    %164 = arith.mulf %162, %163 : vector<8x1xf32>
    %165 = math.sqrt %164 : vector<8x1xf32>
    %cst_76 = arith.constant 9.99999997E-7 : f32
    %166 = vector.broadcast %cst_76 : f32 to vector<8x1xf32>
    %167 = arith.addf %165, %166 : vector<8x1xf32>
    %168 = tpu.reciprocal %167 {approx = true} : vector<8x1xf32> -> vector<8x1xf32>
    %169 = vector.broadcast %168 : vector<8x1xf32> to vector<8x32xf32>
    %170 = arith.mulf %159, %169 : vector<8x32xf32>
    %171 = vector.broadcast %152 : vector<1x32xf32> to vector<8x32xf32>
    %172 = arith.mulf %170, %171 : vector<8x32xf32>
    %173 = vector.broadcast %153 : vector<1x32xf32> to vector<8x32xf32>
    %174 = arith.addf %172, %173 : vector<8x32xf32>
    %175 = arith.addf %137, %174 : vector<8x32xf32>
    %c0_77 = arith.constant 0 : index
    %c0_78 = arith.constant 0 : index
    %c0_79 = arith.constant 0 : index
    %176 = vector.load %arg17[%c0_77, %c0_78, %c0_79] : memref<1x8x32xf32, #tpu.memory_space<vmem>>, vector<1x8x32xf32>
    %177 = vector.shape_cast %176 : vector<1x8x32xf32> to vector<8x32xf32>
    %178 = vector.shape_cast %175 : vector<8x32xf32> to vector<1x8x32xf32>
    tpu.vector_store %arg17[%c0_77, %c0_78, %c0_79], %178 {strides = array<i32>} : memref<1x8x32xf32, #tpu.memory_space<vmem>>, vector<1x8x32xf32>,
    return
  }
  func.func @transform_0(%arg0: i32, %arg1: i32) -> (i32, i32, i32) {
    %c0_i32 = arith.constant 0 : i32
    %c0_i32_0 = arith.constant 0 : i32
    %c0_i32_1 = arith.constant 0 : i32
    return %arg0, %c0_i32, %c0_i32_0 : i32, i32, i32
  }
  func.func @transform_1(%arg0: i32, %arg1: i32) -> (i32, i32, i32) {
    %c0_i32 = arith.constant 0 : i32
    %c0_i32_0 = arith.constant 0 : i32
    return %arg0, %arg1, %c0_i32 : i32, i32, i32
  }
  func.func @transform_2(%arg0: i32, %arg1: i32) -> (i32, i32, i32) {
    %c0_i32 = arith.constant 0 : i32
    %c0_i32_0 = arith.constant 0 : i32
    %c0_i32_1 = arith.constant 0 : i32
    return %arg0, %c0_i32, %c0_i32_0 : i32, i32, i32
  }
  func.func @transform_3(%arg0: i32, %arg1: i32) -> (i32, i32) {
    %c0_i32 = arith.constant 0 : i32
    %c0_i32_0 = arith.constant 0 : i32
    %c0_i32_1 = arith.constant 0 : i32
    return %c0_i32, %c0_i32_0 : i32, i32
  }
  func.func @transform_4(%arg0: i32, %arg1: i32) -> (i32, i32) {
    %c0_i32 = arith.constant 0 : i32
    %c0_i32_0 = arith.constant 0 : i32
    %c0_i32_1 = arith.constant 0 : i32
    return %c0_i32, %c0_i32_0 : i32, i32
  }
  func.func @transform_5(%arg0: i32, %arg1: i32) -> (i32, i32) {
    %c0_i32 = arith.constant 0 : i32
    %c0_i32_0 = arith.constant 0 : i32
    %c0_i32_1 = arith.constant 0 : i32
    return %c0_i32, %c0_i32_0 : i32, i32
  }
  func.func @transform_6(%arg0: i32, %arg1: i32) -> (i32, i32) {
    %c0_i32 = arith.constant 0 : i32
    %c0_i32_0 = arith.constant 0 : i32
    %c0_i32_1 = arith.constant 0 : i32
    return %c0_i32, %c0_i32_0 : i32, i32
  }
  func.func @transform_7(%arg0: i32, %arg1: i32) -> (i32, i32) {
    %c0_i32 = arith.constant 0 : i32
    %c0_i32_0 = arith.constant 0 : i32
    %c0_i32_1 = arith.constant 0 : i32
    return %c0_i32, %c0_i32_0 : i32, i32
  }
  func.func @transform_8(%arg0: i32, %arg1: i32) -> (i32, i32) {
    %c0_i32 = arith.constant 0 : i32
    %c0_i32_0 = arith.constant 0 : i32
    %c0_i32_1 = arith.constant 0 : i32
    return %c0_i32, %c0_i32_0 : i32, i32
  }
  func.func @transform_9(%arg0: i32, %arg1: i32) -> (i32, i32) {
    %c0_i32 = arith.constant 0 : i32
    %c0_i32_0 = arith.constant 0 : i32
    %c0_i32_1 = arith.constant 0 : i32
    return %c0_i32, %c0_i32_0 : i32, i32
  }
  func.func @transform_10(%arg0: i32, %arg1: i32) -> (i32, i32) {
    %c0_i32 = arith.constant 0 : i32
    %c0_i32_0 = arith.constant 0 : i32
    %c0_i32_1 = arith.constant 0 : i32
    return %c0_i32, %c0_i32_0 : i32, i32
  }
  func.func @transform_11(%arg0: i32, %arg1: i32) -> (i32, i32) {
    %c0_i32 = arith.constant 0 : i32
    %c0_i32_0 = arith.constant 0 : i32
    %c0_i32_1 = arith.constant 0 : i32
    return %c0_i32, %c0_i32_0 : i32, i32
  }
  func.func @transform_12(%arg0: i32, %arg1: i32) -> (i32, i32) {
    %c0_i32 = arith.constant 0 : i32
    %c0_i32_0 = arith.constant 0 : i32
    %c0_i32_1 = arith.constant 0 : i32
    return %c0_i32, %c0_i32_0 : i32, i32
  }
  func.func @transform_13(%arg0: i32, %arg1: i32) -> (i32, i32) {
    %c0_i32 = arith.constant 0 : i32
    %c0_i32_0 = arith.constant 0 : i32
    %c0_i32_1 = arith.constant 0 : i32
    return %c0_i32, %c0_i32_0 : i32, i32
  }
  func.func @transform_14(%arg0: i32, %arg1: i32) -> (i32, i32) {
    %c0_i32 = arith.constant 0 : i32
    %c0_i32_0 = arith.constant 0 : i32
    %c0_i32_1 = arith.constant 0 : i32
    return %c0_i32, %c0_i32_0 : i32, i32
  }
  func.func @transform_15(%arg0: i32, %arg1: i32) -> (i32, i32, i32) {
    %c0_i32 = arith.constant 0 : i32
    %c0_i32_0 = arith.constant 0 : i32
    return %arg0, %arg1, %c0_i32 : i32, i32, i32
  }
}

</mosaic_0001>

<llo_original>
// kernel: tpu_custom_call.1
$region0: #{tpu_custom_call.1}
  #allocation0 [shape = 'u32[]', space=smem, size = 0x4, offset = 0x4, fixed_abs, tag = 'smem constant byte address 0x4 - core index']
  #allocation1 [shape = 'u32[144,128]{1,0:T(1,128)}', space=vmem, size = 0x12000, scoped, tag = 'internal scratch']
  #allocation2 [shape = 'f32[8,32]{1,0:T(8,128)}', space=vmem, size = 0x1000, scoped, tag = 'scratch operand']
  %s0 = inlined_call_operand.vmem [shape: f32[2,8,32], index: 0, kind: input, shape index: {}]
  %s1 = inlined_call_operand.vmem [shape: f32[2,8,32], index: 1, kind: input, shape index: {}]
  %s2 = inlined_call_operand.vmem [shape: f32[2,1,8], index: 2, kind: input, shape index: {}]
  %s3 = inlined_call_operand.vmem [shape: bf16[32,96], index: 3, kind: input, shape index: {}]
  %s4 = inlined_call_operand.hbm [shape: f32[1,96], index: 4, kind: input, shape index: {}]
  %s5 = inlined_call_operand.hbm [shape: bf16[32,32], index: 5, kind: input, shape index: {}]
  %s6 = inlined_call_operand.hbm [shape: f32[1,32], index: 6, kind: input, shape index: {}]
  %s7 = inlined_call_operand.hbm [shape: f32[1,32], index: 7, kind: input, shape index: {}]
  %s8 = inlined_call_operand.hbm [shape: f32[1,32], index: 8, kind: input, shape index: {}]
  %s9 = inlined_call_operand.vmem [shape: bf16[32,64], index: 9, kind: input, shape index: {}]
  %s10 = inlined_call_operand.vmem [shape: f32[1,64], index: 10, kind: input, shape index: {}]
  %s11 = inlined_call_operand.vmem [shape: bf16[64,32], index: 11, kind: input, shape index: {}]
  %s12 = inlined_call_operand.vmem [shape: f32[1,32], index: 12, kind: input, shape index: {}]
  %s13 = inlined_call_operand.vmem [shape: f32[1,32], index: 13, kind: input, shape index: {}]
  %s14 = inlined_call_operand.vmem [shape: f32[1,32], index: 14, kind: input, shape index: {}]
  %s15 = inlined_call_operand.hbm [shape: f32[2,8,32], index: 15, kind: output, shape index: {}]
  %s16 = sld [smem:[#allocation0]]
  $region113: #{tpu_custom_call.1} parent=0
    _
  %s18 = ssub.s32 1, %s16
  %s19 = scalar_select 0, %s18, %s16
  $region1: #{tpu_custom_call.1} parent=0
    #allocation3 [shape = 'u8[512]{0}', space=vmem, size = 0x400, scoped, tag = 'input window, operand 4, single buffered']
    #allocation4 [shape = 's32[2]{0}', space=sflag, size = 0x8, scoped, tag = 'scoped memory for tpu_custom_call.1']
    #allocation5 [shape = 's32[2]{0}', space=sflag, size = 0x8, scoped, tag = 'scoped memory for tpu_custom_call.1']
    #allocation6 [shape = 'u8[8192]{0}', space=vmem, size = 0x2000, scoped, tag = 'input window, operand 5, single buffered']
    #allocation7 [shape = 's32[1]{0}', space=sflag, size = 0x4, scoped, tag = 'scoped memory for tpu_custom_call.1']
    #allocation8 [shape = 'u8[512]{0}', space=vmem, size = 0x400, scoped, tag = 'input window, operand 6, single buffered']
    #allocation9 [shape = 'u8[512]{0}', space=vmem, size = 0x400, scoped, tag = 'input window, operand 7, single buffered']
    #allocation10 [shape = 's32[1]{0}', space=sflag, size = 0x4, scoped, tag = 'scoped memory for tpu_custom_call.1']
    #allocation11 [shape = 'u8[512]{0}', space=vmem, size = 0x400, scoped, tag = 'input window, operand 8, single buffered']
    #allocation12 [shape = 'u8[8192]{0}', space=vmem, size = 0x2000, scoped, tag = 'output window, operand 0']
    %20 = vsyncpa [#allocation4], 0
    %21 = vsyncpa [#allocation7], 0
    %22 = vsyncpa [#allocation10], 0
    %23 = vsyncpa [#allocation5], 0
    %s24 = scalar_lea.sflag [#allocation5], 1
    %25 = vsyncpa %s24, 0
    loop: start=0, step=1, limit=4
    $region2: #{tpu_custom_call.1} parent=1 // loop_pre_header
      _
    $region3: #{tpu_custom_call.1} parent=1 // loop_header
      %s27 = sphi 0, %s31
      %p28 = scmp.ge.s32.totalorder %s27, 4
      %s34 = sphi 0, %s46
      %s35 = sphi 0, %s42
      %s36 = sphi 0, %s34
      %s37 = sphi 0, %s35
      %s38 = sphi 0, %s36
      %s39 = sphi 0, %s37
      %s49 = sphi 0, %s51
      %s52 = sphi 0, %s49
      %s53 = sphi 0, %s52
      %s69 = sphi 0, %s53
      %s77 = sphi 0, %s79
      %s80 = sphi 0, %s77
      %s81 = sphi 0, %s80
      %s97 = sphi 0, %s81
      %s103 = sphi 0, %s105
      %s106 = sphi 0, %s103
      %s107 = sphi 0, %s106
      %s123 = sphi 0, %s107
      %s127 = sphi 0, %s127
      %s129 = sphi 0, %s127
      %s130 = sphi 0, %s129
      %s144 = sphi 0, %s130
      %s148 = sphi 0, %s148
      %s150 = sphi 0, %s148
      %s151 = sphi 0, %s150
      %s165 = sphi 0, %s151
      %s169 = sphi 0, %s169
      %s171 = sphi 0, %s169
      %s172 = sphi 0, %s171
      %s186 = sphi 0, %s172
      %s190 = sphi 0, %s190
      %s192 = sphi 0, %s190
      %s193 = sphi 0, %s192
      %s207 = sphi 0, %s193
      %s211 = sphi 0, %s211
      %s213 = sphi 0, %s211
      %s214 = sphi 0, %s213
      %s228 = sphi 0, %s214
      %s232 = sphi 0, %s232
      %s234 = sphi 0, %s232
      %s235 = sphi 0, %s234
      %s249 = sphi 0, %s235
      %s253 = sphi 0, %s253
      %s255 = sphi 0, %s253
      %s256 = sphi 0, %s255
      %s270 = sphi 0, %s256
      %s274 = sphi 0, %s274
      %s276 = sphi 0, %s274
      %s277 = sphi 0, %s276
      %s291 = sphi 0, %s277
      %s295 = sphi 0, %s295
      %s297 = sphi 0, %s295
      %s298 = sphi 0, %s297
      %s312 = sphi 0, %s298
      %s316 = sphi 0, %s316
      %s318 = sphi 0, %s316
      %s319 = sphi 0, %s318
      %s333 = sphi 0, %s319
      %s337 = sphi 0, %s337
      %s339 = sphi 0, %s337
      %s340 = sphi 0, %s339
      %s354 = sphi 0, %s340
      %s358 = sphi 0, %s358
      %s360 = sphi 0, %s358
      %s361 = sphi 0, %s360
      %s375 = sphi 0, %s361
      %s383 = sphi 0, %s385
      %s386 = sphi 0, %s383
      %s387 = sphi 0, %s386
      %s403 = sphi 0, %s387
    $region4: #{tpu_custom_call.1} parent=1 // loop_header_branch
      %30 = sbr.rel (%p28) target = $region8
    $region5: #{tpu_custom_call.1} parent=1 // loop_body
      %s32 = ssub.s32 %s27, 1
      %s33 = ssub.s32 %s27, 2
      %s40 = sadd.s32 1, %s35
      %p41 = scmp.ge.s32.totalorder %s40, 1
      %s42 = scalar_select %p41, 0, %s40
      %s43 = sadd.s32 1, %s34
      %s44 = scalar_select %p41, %s43, %s34
      %p45 = scmp.ge.s32.totalorder %s44, 2
      %s46 = scalar_select %p45, 0, %s44
      %s47 = ssub.s32 %s34, %s46
      %p48 = scmp.eq.s32.totalorder %s47, 0
      %s50 = sadd.s32 %s49, 1
      %s51 = scalar_select %p48, %s49, %s50
      %p54 = pneg %p48
      %p55 = scmp.eq.s32.totalorder %s27, 1
      %p56 = por %p54, %p55
      %p57 = scmp.ne.s32.totalorder %s49, %s52
      %p58 = scmp.eq.s32.totalorder %s27, 0
      %p59 = por %p57, %p58
      %p60 = scmp.ne.s32.totalorder %s49, %s52
      %p61 = scmp.eq.s32.totalorder %s32, 1
      %p62 = por %p60, %p61
      %p63 = scmp.ne.s32.totalorder %s52, %s53
      %p64 = scmp.eq.s32.totalorder %s32, 0
      %p65 = por %p63, %p64
      %p66 = scmp.ne.s32.totalorder %s52, %s53
      %p67 = scmp.eq.s32.totalorder %s33, 1
      %p68 = por %p66, %p67
      %p70 = scmp.ne.s32.totalorder %s53, %s69
      %p71 = scmp.eq.s32.totalorder %s33, 0
      %p72 = por %p70, %p71
      %s73 = ssub.s32 %s34, %s46
      %s74 = ssub.s32 %s35, %s42
      %s75 = sor.u32 %s73, %s74
      %p76 = scmp.eq.s32.totalorder %s75, 0
      %s78 = sadd.s32 %s77, 1
      %s79 = scalar_select %p76, %s77, %s78
      %p82 = pneg %p76
      %p83 = scmp.eq.s32.totalorder %s27, 1
      %p84 = por %p82, %p83
      %p85 = scmp.ne.s32.totalorder %s77, %s80
      %p86 = scmp.eq.s32.totalorder %s27, 0
      %p87 = por %p85, %p86
      %p88 = scmp.ne.s32.totalorder %s77, %s80
      %p89 = scmp.eq.s32.totalorder %s32, 1
      %p90 = por %p88, %p89
      %p91 = scmp.ne.s32.totalorder %s80, %s81
      %p92 = scmp.eq.s32.totalorder %s32, 0
      %p93 = por %p91, %p92
      %p94 = scmp.ne.s32.totalorder %s80, %s81
      %p95 = scmp.eq.s32.totalorder %s33, 1
      %p96 = por %p94, %p95
      %p98 = scmp.ne.s32.totalorder %s81, %s97
      %p99 = scmp.eq.s32.totalorder %s33, 0
      %p100 = por %p98, %p99
      %s101 = ssub.s32 %s34, %s46
      %p102 = scmp.eq.s32.totalorder %s101, 0
      %s104 = sadd.s32 %s103, 1
      %s105 = scalar_select %p102, %s103, %s104
      %p108 = pneg %p102
      %p109 = scmp.eq.s32.totalorder %s27, 1
      %p110 = por %p108, %p109
      %p111 = scmp.ne.s32.totalorder %s103, %s106
      %p112 = scmp.eq.s32.totalorder %s27, 0
      %p113 = por %p111, %p112
      %p114 = scmp.ne.s32.totalorder %s103, %s106
      %p115 = scmp.eq.s32.totalorder %s32, 1
      %p116 = por %p114, %p115
      %p117 = scmp.ne.s32.totalorder %s106, %s107
      %p118 = scmp.eq.s32.totalorder %s32, 0
      %p119 = por %p117, %p118
      %p120 = scmp.ne.s32.totalorder %s106, %s107
      %p121 = scmp.eq.s32.totalorder %s33, 1
      %p122 = por %p120, %p121
      %p124 = scmp.ne.s32.totalorder %s107, %s123
      %p125 = scmp.eq.s32.totalorder %s33, 0
      %p126 = por %p124, %p125
      %s128 = sadd.s32 %s127, 1
      %p131 = scmp.eq.s32.totalorder %s27, 1
      %p132 = scmp.ne.s32.totalorder %s127, %s129
      %p133 = scmp.eq.s32.totalorder %s27, 0
      %p134 = por %p132, %p133
      %p135 = scmp.ne.s32.totalorder %s127, %s129
      %p136 = scmp.eq.s32.totalorder %s32, 1
      %p137 = por %p135, %p136
      %p138 = scmp.ne.s32.totalorder %s129, %s130
      %p139 = scmp.eq.s32.totalorder %s32, 0
      %p140 = por %p138, %p139
      %p141 = scmp.ne.s32.totalorder %s129, %s130
      %p142 = scmp.eq.s32.totalorder %s33, 1
      %p143 = por %p141, %p142
      %p145 = scmp.ne.s32.totalorder %s130, %s144
      %p146 = scmp.eq.s32.totalorder %s33, 0
      %p147 = por %p145, %p146
      %s149 = sadd.s32 %s148, 1
      %p152 = scmp.eq.s32.totalorder %s27, 1
      %p153 = scmp.ne.s32.totalorder %s148, %s150
      %p154 = scmp.eq.s32.totalorder %s27, 0
      %p155 = por %p153, %p154
      %p156 = scmp.ne.s32.totalorder %s148, %s150
      %p157 = scmp.eq.s32.totalorder %s32, 1
      %p158 = por %p156, %p157
      %p159 = scmp.ne.s32.totalorder %s150, %s151
      %p160 = scmp.eq.s32.totalorder %s32, 0
      %p161 = por %p159, %p160
      %p162 = scmp.ne.s32.totalorder %s150, %s151
      %p163 = scmp.eq.s32.totalorder %s33, 1
      %p164 = por %p162, %p163
      %p166 = scmp.ne.s32.totalorder %s151, %s165
      %p167 = scmp.eq.s32.totalorder %s33, 0
      %p168 = por %p166, %p167
      %s170 = sadd.s32 %s169, 1
      %p173 = scmp.eq.s32.totalorder %s27, 1
      %p174 = scmp.ne.s32.totalorder %s169, %s171
      %p175 = scmp.eq.s32.totalorder %s27, 0
      %p176 = por %p174, %p175
      %p177 = scmp.ne.s32.totalorder %s169, %s171
      %p178 = scmp.eq.s32.totalorder %s32, 1
      %p179 = por %p177, %p178
      %p180 = scmp.ne.s32.totalorder %s171, %s172
      %p181 = scmp.eq.s32.totalorder %s32, 0
      %p182 = por %p180, %p181
      %p183 = scmp.ne.s32.totalorder %s171, %s172
      %p184 = scmp.eq.s32.totalorder %s33, 1
      %p185 = por %p183, %p184
      %p187 = scmp.ne.s32.totalorder %s172, %s186
      %p188 = scmp.eq.s32.totalorder %s33, 0
      %p189 = por %p187, %p188
      %s191 = sadd.s32 %s190, 1
      %p194 = scmp.eq.s32.totalorder %s27, 1
      %p195 = scmp.ne.s32.totalorder %s190, %s192
      %p196 = scmp.eq.s32.totalorder %s27, 0
      %p197 = por %p195, %p196
      %p198 = scmp.ne.s32.totalorder %s190, %s192
      %p199 = scmp.eq.s32.totalorder %s32, 1
      %p200 = por %p198, %p199
      %p201 = scmp.ne.s32.totalorder %s192, %s193
      %p202 = scmp.eq.s32.totalorder %s32, 0
      %p203 = por %p201, %p202
      %p204 = scmp.ne.s32.totalorder %s192, %s193
      %p205 = scmp.eq.s32.totalorder %s33, 1
      %p206 = por %p204, %p205
      %p208 = scmp.ne.s32.totalorder %s193, %s207
      %p209 = scmp.eq.s32.totalorder %s33, 0
      %p210 = por %p208, %p209
      %s212 = sadd.s32 %s211, 1
      %p215 = scmp.eq.s32.totalorder %s27, 1
      %p216 = scmp.ne.s32.totalorder %s211, %s213
      %p217 = scmp.eq.s32.totalorder %s27, 0
      %p218 = por %p216, %p217
      %p219 = scmp.ne.s32.totalorder %s211, %s213
      %p220 = scmp.eq.s32.totalorder %s32, 1
      %p221 = por %p219, %p220
      %p222 = scmp.ne.s32.totalorder %s213, %s214
      %p223 = scmp.eq.s32.totalorder %s32, 0
      %p224 = por %p222, %p223
      %p225 = scmp.ne.s32.totalorder %s213, %s214
      %p226 = scmp.eq.s32.totalorder %s33, 1
      %p227 = por %p225, %p226
      %p229 = scmp.ne.s32.totalorder %s214, %s228
      %p230 = scmp.eq.s32.totalorder %s33, 0
      %p231 = por %p229, %p230
      %s233 = sadd.s32 %s232, 1
      %p236 = scmp.eq.s32.totalorder %s27, 1
      %p237 = scmp.ne.s32.totalorder %s232, %s234
      %p238 = scmp.eq.s32.totalorder %s27, 0
      %p239 = por %p237, %p238
      %p240 = scmp.ne.s32.totalorder %s232, %s234
      %p241 = scmp.eq.s32.totalorder %s32, 1
      %p242 = por %p240, %p241
      %p243 = scmp.ne.s32.totalorder %s234, %s235
      %p244 = scmp.eq.s32.totalorder %s32, 0
      %p245 = por %p243, %p244
      %p246 = scmp.ne.s32.totalorder %s234, %s235
      %p247 = scmp.eq.s32.totalorder %s33, 1
      %p248 = por %p246, %p247
      %p250 = scmp.ne.s32.totalorder %s235, %s249
      %p251 = scmp.eq.s32.totalorder %s33, 0
      %p252 = por %p250, %p251
      %s254 = sadd.s32 %s253, 1
      %p257 = scmp.eq.s32.totalorder %s27, 1
      %p258 = scmp.ne.s32.totalorder %s253, %s255
      %p259 = scmp.eq.s32.totalorder %s27, 0
      %p260 = por %p258, %p259
      %p261 = scmp.ne.s32.totalorder %s253, %s255
      %p262 = scmp.eq.s32.totalorder %s32, 1
      %p263 = por %p261, %p262
      %p264 = scmp.ne.s32.totalorder %s255, %s256
      %p265 = scmp.eq.s32.totalorder %s32, 0
      %p266 = por %p264, %p265
      %p267 = scmp.ne.s32.totalorder %s255, %s256
      %p268 = scmp.eq.s32.totalorder %s33, 1
      %p269 = por %p267, %p268
      %p271 = scmp.ne.s32.totalorder %s256, %s270
      %p272 = scmp.eq.s32.totalorder %s33, 0
      %p273 = por %p271, %p272
      %s275 = sadd.s32 %s274, 1
      %p278 = scmp.eq.s32.totalorder %s27, 1
      %p279 = scmp.ne.s32.totalorder %s274, %s276
      %p280 = scmp.eq.s32.totalorder %s27, 0
      %p281 = por %p279, %p280
      %p282 = scmp.ne.s32.totalorder %s274, %s276
      %p283 = scmp.eq.s32.totalorder %s32, 1
      %p284 = por %p282, %p283
      %p285 = scmp.ne.s32.totalorder %s276, %s277
      %p286 = scmp.eq.s32.totalorder %s32, 0
      %p287 = por %p285, %p286
      %p288 = scmp.ne.s32.totalorder %s276, %s277
      %p289 = scmp.eq.s32.totalorder %s33, 1
      %p290 = por %p288, %p289
      %p292 = scmp.ne.s32.totalorder %s277, %s291
      %p293 = scmp.eq.s32.totalorder %s33, 0
      %p294 = por %p292, %p293
      %s296 = sadd.s32 %s295, 1
      %p299 = scmp.eq.s32.totalorder %s27, 1
      %p300 = scmp.ne.s32.totalorder %s295, %s297
      %p301 = scmp.eq.s32.totalorder %s27, 0
      %p302 = por %p300, %p301
      %p303 = scmp.ne.s32.totalorder %s295, %s297
      %p304 = scmp.eq.s32.totalorder %s32, 1
      %p305 = por %p303, %p304
      %p306 = scmp.ne.s32.totalorder %s297, %s298
      %p307 = scmp.eq.s32.totalorder %s32, 0
      %p308 = por %p306, %p307
      %p309 = scmp.ne.s32.totalorder %s297, %s298
      %p310 = scmp.eq.s32.totalorder %s33, 1
      %p311 = por %p309, %p310
      %p313 = scmp.ne.s32.totalorder %s298, %s312
      %p314 = scmp.eq.s32.totalorder %s33, 0
      %p315 = por %p313, %p314
      %s317 = sadd.s32 %s316, 1
      %p320 = scmp.eq.s32.totalorder %s27, 1
      %p321 = scmp.ne.s32.totalorder %s316, %s318
      %p322 = scmp.eq.s32.totalorder %s27, 0
      %p323 = por %p321, %p322
      %p324 = scmp.ne.s32.totalorder %s316, %s318
      %p325 = scmp.eq.s32.totalorder %s32, 1
      %p326 = por %p324, %p325
      %p327 = scmp.ne.s32.totalorder %s318, %s319
      %p328 = scmp.eq.s32.totalorder %s32, 0
      %p329 = por %p327, %p328
      %p330 = scmp.ne.s32.totalorder %s318, %s319
      %p331 = scmp.eq.s32.totalorder %s33, 1
      %p332 = por %p330, %p331
      %p334 = scmp.ne.s32.totalorder %s319, %s333
      %p335 = scmp.eq.s32.totalorder %s33, 0
      %p336 = por %p334, %p335
      %s338 = sadd.s32 %s337, 1
      %p341 = scmp.eq.s32.totalorder %s27, 1
      %p342 = scmp.ne.s32.totalorder %s337, %s339
      %p343 = scmp.eq.s32.totalorder %s27, 0
      %p344 = por %p342, %p343
      %p345 = scmp.ne.s32.totalorder %s337, %s339
      %p346 = scmp.eq.s32.totalorder %s32, 1
      %p347 = por %p345, %p346
      %p348 = scmp.ne.s32.totalorder %s339, %s340
      %p349 = scmp.eq.s32.totalorder %s32, 0
      %p350 = por %p348, %p349
      %p351 = scmp.ne.s32.totalorder %s339, %s340
      %p352 = scmp.eq.s32.totalorder %s33, 1
      %p353 = por %p351, %p352
      %p355 = scmp.ne.s32.totalorder %s340, %s354
      %p356 = scmp.eq.s32.totalorder %s33, 0
      %p357 = por %p355, %p356
      %s359 = sadd.s32 %s358, 1
      %p362 = scmp.eq.s32.totalorder %s27, 1
      %p363 = scmp.ne.s32.totalorder %s358, %s360
      %p364 = scmp.eq.s32.totalorder %s27, 0
      %p365 = por %p363, %p364
      %p366 = scmp.ne.s32.totalorder %s358, %s360
      %p367 = scmp.eq.s32.totalorder %s32, 1
      %p368 = por %p366, %p367
      %p369 = scmp.ne.s32.totalorder %s360, %s361
      %p370 = scmp.eq.s32.totalorder %s32, 0
      %p371 = por %p369, %p370
      %p372 = scmp.ne.s32.totalorder %s360, %s361
      %p373 = scmp.eq.s32.totalorder %s33, 1
      %p374 = por %p372, %p373
      %p376 = scmp.ne.s32.totalorder %s361, %s375
      %p377 = scmp.eq.s32.totalorder %s33, 0
      %p378 = por %p376, %p377
      %s379 = ssub.s32 %s34, %s46
      %s380 = ssub.s32 %s35, %s42
      %s381 = sor.u32 %s379, %s380
      %p382 = scmp.eq.s32.totalorder %s381, 0
      %s384 = sadd.s32 %s383, 1
      %s385 = scalar_select %p382, %s383, %s384
      %p388 = pneg %p382
      %p389 = scmp.eq.s32.totalorder %s27, 1
      %p390 = por %p388, %p389
      %p391 = scmp.ne.s32.totalorder %s383, %s386
      %p392 = scmp.eq.s32.totalorder %s27, 0
      %p393 = por %p391, %p392
      %p394 = scmp.ne.s32.totalorder %s383, %s386
      %p395 = scmp.eq.s32.totalorder %s32, 1
      %p396 = por %p394, %p395
      %p397 = scmp.ne.s32.totalorder %s386, %s387
      %p398 = scmp.eq.s32.totalorder %s32, 0
      %p399 = por %p397, %p398
      %p400 = scmp.ne.s32.totalorder %s386, %s387
      %p401 = scmp.eq.s32.totalorder %s33, 1
      %p402 = por %p400, %p401
      %p404 = scmp.ne.s32.totalorder %s387, %s403
      %p405 = scmp.eq.s32.totalorder %s33, 0
      %p406 = por %p404, %p405
      %p407 = scmp.le.s32.totalorder 1, %s27
      %p408 = scmp.lt.s32.totalorder %s27, 3
      %p409 = pnand %p407, %p408
      %p410 = pneg %p409
      // Predicated region
      $region9: #{tpu_custom_call.1} parent=5 // pred_check
        _
      $region10: #{tpu_custom_call.1} parent=5 // pred_check_branch
        %412 = sbr.rel (%p409) target = $region12
      $region11: #{tpu_custom_call.1} parent=5 // pred_region
        %s413 = ssub.s32 %s27, 1
        // Predicated region
        $region13: #{tpu_custom_call.1} parent=11 // pred_check
          %p414 = pneg %p140
        $region14: #{tpu_custom_call.1} parent=11 // pred_check_branch
          %416 = sbr.rel (%p414) target = $region16
        $region15: #{tpu_custom_call.1} parent=11 // pred_region
          _
        $region16: #{tpu_custom_call.1} parent=11 // pred_fallthru
          _
        // Predicated region
        $region17: #{tpu_custom_call.1} parent=11 // pred_check
          %p417 = pneg %p161
        $region18: #{tpu_custom_call.1} parent=11 // pred_check_branch
          %419 = sbr.rel (%p417) target = $region20
        $region19: #{tpu_custom_call.1} parent=11 // pred_region
          %s421 = ssub.s32 16, 16
          %422 = vsyncadd [#allocation4], %s421
          %s424 = sshll.u32 [#allocation3], 4
          %s425 = int_to_ptr.vmem [resolvable:$true] %s424
          %427 = dma.hbm_to_vmem [thread:$0]  %s4, 16, %s425, [#allocation4]
        $region20: #{tpu_custom_call.1} parent=11 // pred_fallthru
          _
        // Predicated region
        $region21: #{tpu_custom_call.1} parent=11 // pred_check
          %p428 = pneg %p182
        $region22: #{tpu_custom_call.1} parent=11 // pred_check_branch
          %430 = sbr.rel (%p428) target = $region24
        $region23: #{tpu_custom_call.1} parent=11 // pred_region
          %s432 = ssub.s32 256, 256
          %433 = vsyncadd [#allocation7], %s432
          %s434 = sshll.u32 [#allocation6], 4
          %s435 = int_to_ptr.vmem [resolvable:$true] %s434
          %440 = dma.hbm_to_vmem [thread:$0]  %s5, 256, %s435, [#allocation7], 64, 64, 4
        $region24: #{tpu_custom_call.1} parent=11 // pred_fallthru
          _
        // Predicated region
        $region25: #{tpu_custom_call.1} parent=11 // pred_check
          %p441 = pneg %p203
        $region26: #{tpu_custom_call.1} parent=11 // pred_check_branch
          %443 = sbr.rel (%p441) target = $region28
        $region27: #{tpu_custom_call.1} parent=11 // pred_region
          %s445 = ssub.s32 16, 16
          %446 = vsyncadd [#allocation7], %s445
          %s448 = sshll.u32 [#allocation8], 4
          %s449 = int_to_ptr.vmem [resolvable:$true] %s448
          %451 = dma.hbm_to_vmem [thread:$0]  %s6, 16, %s449, [#allocation7]
        $region28: #{tpu_custom_call.1} parent=11 // pred_fallthru
          _
        // Predicated region
        $region29: #{tpu_custom_call.1} parent=11 // pred_check
          %p452 = pneg %p224
        $region30: #{tpu_custom_call.1} parent=11 // pred_check_branch
          %454 = sbr.rel (%p452) target = $region32
        $region31: #{tpu_custom_call.1} parent=11 // pred_region
          %s456 = ssub.s32 16, 16
          %457 = vsyncadd [#allocation10], %s456
          %s459 = sshll.u32 [#allocation9], 4
          %s460 = int_to_ptr.vmem [resolvable:$true] %s459
          %462 = dma.hbm_to_vmem [thread:$0]  %s7, 16, %s460, [#allocation10]
        $region32: #{tpu_custom_call.1} parent=11 // pred_fallthru
          _
        // Predicated region
        $region33: #{tpu_custom_call.1} parent=11 // pred_check
          %p463 = pneg %p245
        $region34: #{tpu_custom_call.1} parent=11 // pred_check_branch
          %465 = sbr.rel (%p463) target = $region36
        $region35: #{tpu_custom_call.1} parent=11 // pred_region
          %s467 = ssub.s32 16, 16
          %468 = vsyncadd [#allocation10], %s467
          %s470 = sshll.u32 [#allocation11], 4
          %s471 = int_to_ptr.vmem [resolvable:$true] %s470
          %473 = dma.hbm_to_vmem [thread:$0]  %s8, 16, %s471, [#allocation10]
        $region36: #{tpu_custom_call.1} parent=11 // pred_fallthru
          _
        // Predicated region
        $region37: #{tpu_custom_call.1} parent=11 // pred_check
          %p474 = pneg %p266
        $region38: #{tpu_custom_call.1} parent=11 // pred_check_branch
          %476 = sbr.rel (%p474) target = $region40
        $region39: #{tpu_custom_call.1} parent=11 // pred_region
          _
        $region40: #{tpu_custom_call.1} parent=11 // pred_fallthru
          _
        // Predicated region
        $region41: #{tpu_custom_call.1} parent=11 // pred_check
          %p477 = pneg %p287
        $region42: #{tpu_custom_call.1} parent=11 // pred_check_branch
          %479 = sbr.rel (%p477) target = $region44
        $region43: #{tpu_custom_call.1} parent=11 // pred_region
          _
        $region44: #{tpu_custom_call.1} parent=11 // pred_fallthru
          _
        // Predicated region
        $region45: #{tpu_custom_call.1} parent=11 // pred_check
          %p480 = pneg %p308
        $region46: #{tpu_custom_call.1} parent=11 // pred_check_branch
          %482 = sbr.rel (%p480) target = $region48
        $region47: #{tpu_custom_call.1} parent=11 // pred_region
          _
        $region48: #{tpu_custom_call.1} parent=11 // pred_fallthru
          _
        // Predicated region
        $region49: #{tpu_custom_call.1} parent=11 // pred_check
          %p483 = pneg %p329
        $region50: #{tpu_custom_call.1} parent=11 // pred_check_branch
          %485 = sbr.rel (%p483) target = $region52
        $region51: #{tpu_custom_call.1} parent=11 // pred_region
          _
        $region52: #{tpu_custom_call.1} parent=11 // pred_fallthru
          _
        // Predicated region
        $region53: #{tpu_custom_call.1} parent=11 // pred_check
          %p486 = pneg %p350
        $region54: #{tpu_custom_call.1} parent=11 // pred_check_branch
          %488 = sbr.rel (%p486) target = $region56
        $region55: #{tpu_custom_call.1} parent=11 // pred_region
          _
        $region56: #{tpu_custom_call.1} parent=11 // pred_fallthru
          _
        // Predicated region
        $region57: #{tpu_custom_call.1} parent=11 // pred_check
          %p489 = pneg %p371
        $region58: #{tpu_custom_call.1} parent=11 // pred_check_branch
          %491 = sbr.rel (%p489) target = $region60
        $region59: #{tpu_custom_call.1} parent=11 // pred_region
          _
        $region60: #{tpu_custom_call.1} parent=11 // pred_fallthru
          _
      $region12: #{tpu_custom_call.1} parent=5 // pred_fallthru
        _
      %p492 = scmp.lt.s32.totalorder %s27, 2
      // Predicated region
      $region61: #{tpu_custom_call.1} parent=5 // pred_check
        %p493 = pneg %p492
      $region62: #{tpu_custom_call.1} parent=5 // pred_check_branch
        %495 = sbr.rel (%p493) target = $region64
      $region63: #{tpu_custom_call.1} parent=5 // pred_region
        // Predicated region
        $region65: #{tpu_custom_call.1} parent=63 // pred_check
          %p496 = pneg %p59
        $region66: #{tpu_custom_call.1} parent=63 // pred_check_branch
          %498 = sbr.rel (%p496) target = $region68
        $region67: #{tpu_custom_call.1} parent=63 // pred_region
          %p499 = scmp.lt.s32.totalorder %s34, 1
          %s500 = scalar_select %p499, %s34, 1
          %s501 = smul.addr %s500, 8
          %s502 = scalar_lea.vmem %s0, %s501
        $region68: #{tpu_custom_call.1} parent=63 // pred_fallthru
          _
        // Predicated region
        $region69: #{tpu_custom_call.1} parent=63 // pred_check
          %p503 = pneg %p87
        $region70: #{tpu_custom_call.1} parent=63 // pred_check_branch
          %505 = sbr.rel (%p503) target = $region72
        $region71: #{tpu_custom_call.1} parent=63 // pred_region
          %p506 = scmp.lt.s32.totalorder %s34, 1
          %s507 = scalar_select %p506, %s34, 1
          %p508 = scmp.lt.s32.totalorder %s35, 0
          %s509 = scalar_select %p508, %s35, 0
          %s510 = sadd.s32 %s509, %s507
          %s511 = smul.addr %s510, 8
          %s512 = scalar_lea.vmem %s1, %s511
        $region72: #{tpu_custom_call.1} parent=63 // pred_fallthru
          _
        // Predicated region
        $region73: #{tpu_custom_call.1} parent=63 // pred_check
          %p513 = pneg %p113
        $region74: #{tpu_custom_call.1} parent=63 // pred_check_branch
          %515 = sbr.rel (%p513) target = $region76
        $region75: #{tpu_custom_call.1} parent=63 // pred_region
          %p516 = scmp.lt.s32.totalorder %s34, 1
          %s517 = scalar_select %p516, %s34, 1
          %s518 = scalar_lea.vmem %s2, %s517
        $region76: #{tpu_custom_call.1} parent=63 // pred_fallthru
          _
      $region64: #{tpu_custom_call.1} parent=5 // pred_fallthru
        _
      %p519 = scmp.le.s32.totalorder 1, %s27
      %p520 = scmp.lt.s32.totalorder %s27, 3
      %p521 = pnand %p519, %p520
      %p522 = pneg %p521
      // Predicated region
      $region77: #{tpu_custom_call.1} parent=5 // pred_check
        _
      $region78: #{tpu_custom_call.1} parent=5 // pred_check_branch
        %524 = sbr.rel (%p521) target = $region80
      $region79: #{tpu_custom_call.1} parent=5 // pred_region
        %s525 = ssub.s32 %s27, 1
        // Predicated region
        $region81: #{tpu_custom_call.1} parent=79 // pred_check
          %p526 = pneg %p161
        $region82: #{tpu_custom_call.1} parent=79 // pred_check_branch
          %528 = sbr.rel (%p526) target = $region84
        $region83: #{tpu_custom_call.1} parent=79 // pred_region
          %529 = dma.done [#allocation4], 16
        $region84: #{tpu_custom_call.1} parent=79 // pred_fallthru
          _
        // Predicated region
        $region85: #{tpu_custom_call.1} parent=79 // pred_check
          %p530 = pneg %p182
        $region86: #{tpu_custom_call.1} parent=79 // pred_check_branch
          %532 = sbr.rel (%p530) target = $region88
        $region87: #{tpu_custom_call.1} parent=79 // pred_region
          %533 = dma.done [#allocation7], 256
        $region88: #{tpu_custom_call.1} parent=79 // pred_fallthru
          _
        // Predicated region
        $region89: #{tpu_custom_call.1} parent=79 // pred_check
          %p534 = pneg %p203
        $region90: #{tpu_custom_call.1} parent=79 // pred_check_branch
          %536 = sbr.rel (%p534) target = $region92
        $region91: #{tpu_custom_call.1} parent=79 // pred_region
          %537 = dma.done [#allocation7], 16
        $region92: #{tpu_custom_call.1} parent=79 // pred_fallthru
          _
        // Predicated region
        $region93: #{tpu_custom_call.1} parent=79 // pred_check
          %p538 = pneg %p224
        $region94: #{tpu_custom_call.1} parent=79 // pred_check_branch
          %540 = sbr.rel (%p538) target = $region96
        $region95: #{tpu_custom_call.1} parent=79 // pred_region
          %541 = dma.done [#allocation10], 16
        $region96: #{tpu_custom_call.1} parent=79 // pred_fallthru
          _
        // Predicated region
        $region97: #{tpu_custom_call.1} parent=79 // pred_check
          %p542 = pneg %p245
        $region98: #{tpu_custom_call.1} parent=79 // pred_check_branch
          %544 = sbr.rel (%p542) target = $region100
        $region99: #{tpu_custom_call.1} parent=79 // pred_region
          %545 = dma.done [#allocation10], 16
        $region100: #{tpu_custom_call.1} parent=79 // pred_fallthru
          _
        %p546 = scmp.lt.s32.totalorder %s36, 1
        %s547 = scalar_select %p546, %s36, 1
        %s548 = smul.addr %s547, 8
        %s549 = scalar_lea.vmem %s0, %s548
        %p550 = pneg %p65
        %p551 = pneg %p62
        %p552 = scmp.lt.s32.totalorder %s36, 1
        %s553 = scalar_select %p552, %s36, 1
        %p554 = scmp.lt.s32.totalorder %s37, 0
        %s555 = scalar_select %p554, %s37, 0
        %s556 = sadd.s32 %s555, %s553
        %s557 = smul.addr %s556, 8
        %s558 = scalar_lea.vmem %s1, %s557
        %p559 = pneg %p93
        %p560 = pneg %p90
        %p561 = scmp.lt.s32.totalorder %s36, 1
        %s562 = scalar_select %p561, %s36, 1
        %s563 = scalar_lea.vmem %s2, %s562
        %p564 = pneg %p119
        %p565 = pneg %p116
        %p566 = pneg %p140
        %p567 = pneg %p137
        %p568 = pneg %p161
        %p569 = pneg %p158
        %p570 = pneg %p182
        %p571 = pneg %p179
        %p572 = pneg %p203
        %p573 = pneg %p200
        %p574 = pneg %p224
        %p575 = pneg %p221
        %p576 = pneg %p245
        %p577 = pneg %p242
        %p578 = pneg %p266
        %p579 = pneg %p263
        %p580 = pneg %p287
        %p581 = pneg %p284
        %p582 = pneg %p308
        %p583 = pneg %p305
        %p584 = pneg %p329
        %p585 = pneg %p326
        %p586 = pneg %p350
        %p587 = pneg %p347
        %p588 = pneg %p371
        %p589 = pneg %p368
        %p590 = pneg %p399
        %p591 = pneg %p396
        %s592 = sand.u32 %s386, 1
        %s593 = scalar_lea.sflag [#allocation5], %s592
        %s594 = sand.u32 %s386, 1
        %s595 = smul.addr %s594, 8
        %s596 = scalar_lea.vmem [#allocation12], %s595
        %p597 = scmp.lt.s32.totalorder %s36, 1
        %s598 = scalar_select %p597, %s36, 1
        %s599 = smul.addr %s598, 8
        %s600 = scalar_lea.vmem %s0, %s599
        %p601 = scmp.lt.s32.totalorder %s36, 1
        %s602 = scalar_select %p601, %s36, 1
        %p603 = scmp.lt.s32.totalorder %s37, 0
        %s604 = scalar_select %p603, %s37, 0
        %s605 = sadd.s32 %s604, %s602
        %s606 = smul.addr %s605, 8
        %s607 = scalar_lea.vmem %s1, %s606
        %p608 = scmp.lt.s32.totalorder %s36, 1
        %s609 = scalar_select %p608, %s36, 1
        %s610 = scalar_lea.vmem %s2, %s609
        %v612 = vld [vmem:[%s600] sm:$0xff]
        %v613 = vld [vmem:[%s607] sm:$0xff]
        %v614 = vld [vmem:[%s610] sm:$0x1]
        %v615 = vpack.c.bf16 %v612, %v612
        %v616 = vpack.c.bf16 %v613, %v613
        %v617 = vld [vmem:[%s3] sm:$0xf]
        %v618 = vld [vmem:[%s3 + $0x4] sm:$0xf]
        %v619 = vld [vmem:[%s3 + $0x8] sm:$0xf]
        %v620 = vld [vmem:[%s3 + $0xc] sm:$0xf]
        %v621 = vld [vmem:[#allocation3] sm:$0x1]
        %v623 = vlaneseq
        %v624 = vshrl.u32 %v623, 7
        %v625 = vsub.s32 0, %v624
        %v626 = vrot.slane %v621, %v625
        %v632 = vunpack.c.l.b16 %v617
        %v633 = vunpack.c.l.b16 %v618
        %v634 = vunpack.c.l.b16 %v619
        %v635 = vunpack.c.l.b16 %v620
        %v636 = vpack.c.b16 %v633, %v632
        %v637 = vpack.c.b16 %v635, %v634
        %vm640 = vcmask 261120
        %v642 = vsel %vm640, %v616, 0
        %644 = vmatprep.subr.bf16.mxu0 0
        %645 = vmatpush1.bf16.msra.mxu0 %v636
        %646 = vmatprep.subr.bf16.mxu0 0
        %647 = vmatpush1.bf16.msra.mxu0 %v637
        %648 = vmatprep.subr.bf16.mxu0 0
        %649 = vmatpush1.bf16.msra.mxu0 0
        %650 = vmatprep.subr.bf16.mxu0 0
        %651 = vmatpush1.bf16.msra.mxu0 0
        %652 = vmatprep.subr.bf16.mxu0 0
        %653 = vmatpush1.bf16.msra.mxu0 0
        %654 = vmatprep.subr.bf16.mxu0 0
        %655 = vmatpush1.bf16.msra.mxu0 0
        %656 = vmatprep.subr.bf16.mxu0 0
        %657 = vmatpush1.bf16.msra.mxu0 0
        %658 = vmatprep.subr.bf16.mxu0 0
        %659 = vmatpush1.bf16.msra.mxu0 0
        %660 = vmatprep.subr.bf16.mxu0 0
        %661 = vmatpush1.bf16.msra.mxu0 0
        %662 = vmatprep.subr.bf16.mxu0 0
        %663 = vmatpush1.bf16.msra.mxu0 0
        %664 = vmatprep.subr.bf16.mxu0 0
        %665 = vmatpush1.bf16.msra.mxu0 0
        %666 = vmatprep.subr.bf16.mxu0 0
        %667 = vmatpush1.bf16.msra.mxu0 0
        %668 = vmatprep.subr.bf16.mxu0 0
        %669 = vmatpush1.bf16.msra.mxu0 0
        %670 = vmatprep.subr.bf16.mxu0 0
        %671 = vmatpush1.bf16.msra.mxu0 0
        %672 = vmatprep.subr.bf16.mxu0 0
        %673 = vmatpush1.bf16.msra.mxu0 0
        %674 = vmatprep.subr.bf16.mxu0 0
        %675 = vmatpush1.bf16.msra.mxu0 0
        %676 = vmatprep.mubr.bf16.mxu0 0
        %677 = vmatmul.mubr.bf16.gmra.mrb[0].mxu0 %v642
        %v678 = vpop.f32.mrb[0].mxu0
        %v679 = vadd.f32 %v626, %v678
        %v680 = vpop.f32.mrb[0].mxu0
        %v681 = vpop.f32.mrb[0].mxu0
        %v682 = vpop.f32.mrb[0].mxu0
        %683 = vdwg.mxu0
        %684 = vrot.lane.b32.xlu0 %v636, 96
        %v685 = vpop.permute.xlu0 %684
        %686 = vrot.lane.b32.xlu0 %v637, 96
        %v687 = vpop.permute.xlu0 %686
        %690 = vrot.lane.b32.xlu0 %v626, 96
        %v691 = vpop.permute.xlu0 %690
        %v694 = vsel %vm640, %v615, 0
        %696 = vmatprep.subr.bf16.mxu0 0
        %697 = vmatpush1.bf16.msra.mxu0 %v685
        %698 = vmatprep.subr.bf16.mxu0 0
        %699 = vmatpush1.bf16.msra.mxu0 %v687
        %700 = vmatprep.subr.bf16.mxu0 0
        %701 = vmatpush1.bf16.msra.mxu0 0
        %702 = vmatprep.subr.bf16.mxu0 0
        %703 = vmatpush1.bf16.msra.mxu0 0
        %704 = vmatprep.subr.bf16.mxu0 0
        %705 = vmatpush1.bf16.msra.mxu0 0
        %706 = vmatprep.subr.bf16.mxu0 0
        %707 = vmatpush1.bf16.msra.mxu0 0
        %708 = vmatprep.subr.bf16.mxu0 0
        %709 = vmatpush1.bf16.msra.mxu0 0
        %710 = vmatprep.subr.bf16.mxu0 0
        %711 = vmatpush1.bf16.msra.mxu0 0
        %712 = vmatprep.subr.bf16.mxu0 0
        %713 = vmatpush1.bf16.msra.mxu0 0
        %714 = vmatprep.subr.bf16.mxu0 0
        %715 = vmatpush1.bf16.msra.mxu0 0
        %716 = vmatprep.subr.bf16.mxu0 0
        %717 = vmatpush1.bf16.msra.mxu0 0
        %718 = vmatprep.subr.bf16.mxu0 0
        %719 = vmatpush1.bf16.msra.mxu0 0
        %720 = vmatprep.subr.bf16.mxu0 0
        %721 = vmatpush1.bf16.msra.mxu0 0
        %722 = vmatprep.subr.bf16.mxu0 0
        %723 = vmatpush1.bf16.msra.mxu0 0
        %724 = vmatprep.subr.bf16.mxu0 0
        %725 = vmatpush1.bf16.msra.mxu0 0
        %726 = vmatprep.subr.bf16.mxu0 0
        %727 = vmatpush1.bf16.msra.mxu0 0
        %728 = vmatprep.mubr.bf16.mxu0 0
        %729 = vmatmul.mubr.bf16.gmra.mrb[0].mxu0 %v694
        %v730 = vpop.f32.mrb[0].mxu0
        %v731 = vadd.f32 %v691, %v730
        %v732 = vpop.f32.mrb[0].mxu0
        %v733 = vpop.f32.mrb[0].mxu0
        %v734 = vpop.f32.mrb[0].mxu0
        %735 = vdwg.mxu0
        %v736 = vpack.c.bf16 %v679, %v679
        %v737 = vpack.c.bf16 %v731, %v731
        %vm738 = vcmask 64512
        %v740 = vsel %vm738, %v736, 0
        %v743 = vsel %vm738, %v737, 0
        %745 = vmatprep.subr.bf16.mxu0 0
        %746 = vmatpush1.bf16.xpose.msra.mxu0 %v743
        %747 = vmatprep.subr.bf16.mxu0 0
        %748 = vmatpush1.bf16.xpose.msra.mxu0 0
        %749 = vmatprep.subr.bf16.mxu0 0
        %750 = vmatpush1.bf16.xpose.msra.mxu0 0
        %751 = vmatprep.subr.bf16.mxu0 0
        %752 = vmatpush1.bf16.xpose.msra.mxu0 0
        %753 = vmatprep.subr.bf16.mxu0 0
        %754 = vmatpush1.bf16.xpose.msra.mxu0 0
        %755 = vmatprep.subr.bf16.mxu0 0
        %756 = vmatpush1.bf16.xpose.msra.mxu0 0
        %757 = vmatprep.subr.bf16.mxu0 0
        %758 = vmatpush1.bf16.xpose.msra.mxu0 0
        %759 = vmatprep.subr.bf16.mxu0 0
        %760 = vmatpush1.bf16.xpose.msra.mxu0 0
        %761 = vmatprep.subr.bf16.mxu0 0
        %762 = vmatpush1.bf16.xpose.msra.mxu0 0
        %763 = vmatprep.subr.bf16.mxu0 0
        %764 = vmatpush1.bf16.xpose.msra.mxu0 0
        %765 = vmatprep.subr.bf16.mxu0 0
        %766 = vmatpush1.bf16.xpose.msra.mxu0 0
        %767 = vmatprep.subr.bf16.mxu0 0
        %768 = vmatpush1.bf16.xpose.msra.mxu0 0
        %769 = vmatprep.subr.bf16.mxu0 0
        %770 = vmatpush1.bf16.xpose.msra.mxu0 0
        %771 = vmatprep.subr.bf16.mxu0 0
        %772 = vmatpush1.bf16.xpose.msra.mxu0 0
        %773 = vmatprep.subr.bf16.mxu0 0
        %774 = vmatpush1.bf16.xpose.msra.mxu0 0
        %775 = vmatprep.subr.bf16.mxu0 0
        %776 = vmatpush1.bf16.xpose.msra.mxu0 0
        %777 = vmatprep.mubr.bf16.mxu0 0
        %778 = vmatmul.mubr.bf16.gmra.mrb[0].mxu0 %v740
        %v779 = vpop.f32.mrb[0].mxu0
        %v780 = vadd.f32 0.0, %v779
        %v781 = vpop.f32.mrb[0].mxu0
        %v782 = vpop.f32.mrb[0].mxu0
        %v783 = vpop.f32.mrb[0].mxu0
        %784 = vdwg.mxu0
        %v785 = vmul.f32 %v780, 0.35355338
        %v787 = vlaneseq
        %v788 = vshrl.u32 %v787, 7
        %v789 = vsub.s32 0, %v788
        %v790 = vrot.slane %v614, %v789
        %v792 = vadd.f32 %v785, %v790
        %v793 = vsel %vm738, %v792, -inf
        %794 = vmax.xlane.f32.xlu0 %v793
        %v795 = vpop.xlane.xlu0 %794
        %v796 = vsub.f32 %v792, %v795
        %v797 = vmul.f32 %v796, 1.442695
        %v798 = vpow.pop %v797
        %v799 = vsel %vm738, %v798, 0.0
        %800 = vadd.xlane.f32.xlu0 %v799
        %v801 = vpop.xlane.xlu0 %800
        %v802 = vrcp.pop %v801
        %v803 = vmul.f32 %v798, %v802
        %v804 = vpack.c.bf16 %v803, %v803
        %806 = vrot.lane.b32.xlu0 %v737, 96
        %v807 = vpop.permute.xlu0 %806
        %v809 = vsel %vm738, %v804, 0
        %vm811 = vcmask 1043456
        %v813 = vsel %vm811, %v807, 0
        %815 = vmatprep.subr.bf16.mxu0 0
        %816 = vmatpush1.bf16.msra.mxu0 %v813
        %817 = vmatprep.subr.bf16.mxu0 0
        %818 = vmatpush1.bf16.msra.mxu0 0
        %819 = vmatprep.subr.bf16.mxu0 0
        %820 = vmatpush1.bf16.msra.mxu0 0
        %821 = vmatprep.subr.bf16.mxu0 0
        %822 = vmatpush1.bf16.msra.mxu0 0
        %823 = vmatprep.subr.bf16.mxu0 0
        %824 = vmatpush1.bf16.msra.mxu0 0
        %825 = vmatprep.subr.bf16.mxu0 0
        %826 = vmatpush1.bf16.msra.mxu0 0
        %827 = vmatprep.subr.bf16.mxu0 0
        %828 = vmatpush1.bf16.msra.mxu0 0
        %829 = vmatprep.subr.bf16.mxu0 0
        %830 = vmatpush1.bf16.msra.mxu0 0
        %831 = vmatprep.subr.bf16.mxu0 0
        %832 = vmatpush1.bf16.msra.mxu0 0
        %833 = vmatprep.subr.bf16.mxu0 0
        %834 = vmatpush1.bf16.msra.mxu0 0
        %835 = vmatprep.subr.bf16.mxu0 0
        %836 = vmatpush1.bf16.msra.mxu0 0
        %837 = vmatprep.subr.bf16.mxu0 0
        %838 = vmatpush1.bf16.msra.mxu0 0
        %839 = vmatprep.subr.bf16.mxu0 0
        %840 = vmatpush1.bf16.msra.mxu0 0
        %841 = vmatprep.subr.bf16.mxu0 0
        %842 = vmatpush1.bf16.msra.mxu0 0
        %843 = vmatprep.subr.bf16.mxu0 0
        %844 = vmatpush1.bf16.msra.mxu0 0
        %845 = vmatprep.subr.bf16.mxu0 0
        %846 = vmatpush1.bf16.msra.mxu0 0
        %847 = vmatprep.mubr.bf16.mxu0 0
        %848 = vmatmul.mubr.bf16.gmra.mrb[0].mxu0 %v809
        %v849 = vpop.f32.mrb[0].mxu0
        %v850 = vadd.f32 0.0, %v849
        %v851 = vpop.f32.mrb[0].mxu0
        %v852 = vpop.f32.mrb[0].mxu0
        %v853 = vpop.f32.mrb[0].mxu0
        %854 = vdwg.mxu0
        %855 = vst.msk [vmem:[#allocation2] sm:$0xff] %vm738, %v850
        %857 = vrot.lane.b32.xlu0 %v736, 120
        %v858 = vpop.permute.xlu0 %857
        %859 = vrot.lane.b32.xlu0 %v737, 120
        %v860 = vpop.permute.xlu0 %859
        %v862 = vsel %vm738, %v858, 0
        %v865 = vsel %vm738, %v860, 0
        %867 = vmatprep.subr.bf16.mxu0 0
        %868 = vmatpush1.bf16.xpose.msra.mxu0 %v865
        %869 = vmatprep.subr.bf16.mxu0 0
        %870 = vmatpush1.bf16.xpose.msra.mxu0 0
        %871 = vmatprep.subr.bf16.mxu0 0
        %872 = vmatpush1.bf16.xpose.msra.mxu0 0
        %873 = vmatprep.subr.bf16.mxu0 0
        %874 = vmatpush1.bf16.xpose.msra.mxu0 0
        %875 = vmatprep.subr.bf16.mxu0 0
        %876 = vmatpush1.bf16.xpose.msra.mxu0 0
        %877 = vmatprep.subr.bf16.mxu0 0
        %878 = vmatpush1.bf16.xpose.msra.mxu0 0
        %879 = vmatprep.subr.bf16.mxu0 0
        %880 = vmatpush1.bf16.xpose.msra.mxu0 0
        %881 = vmatprep.subr.bf16.mxu0 0
        %882 = vmatpush1.bf16.xpose.msra.mxu0 0
        %883 = vmatprep.subr.bf16.mxu0 0
        %884 = vmatpush1.bf16.xpose.msra.mxu0 0
        %885 = vmatprep.subr.bf16.mxu0 0
        %886 = vmatpush1.bf16.xpose.msra.mxu0 0
        %887 = vmatprep.subr.bf16.mxu0 0
        %888 = vmatpush1.bf16.xpose.msra.mxu0 0
        %889 = vmatprep.subr.bf16.mxu0 0
        %890 = vmatpush1.bf16.xpose.msra.mxu0 0
        %891 = vmatprep.subr.bf16.mxu0 0
        %892 = vmatpush1.bf16.xpose.msra.mxu0 0
        %893 = vmatprep.subr.bf16.mxu0 0
        %894 = vmatpush1.bf16.xpose.msra.mxu0 0
        %895 = vmatprep.subr.bf16.mxu0 0
        %896 = vmatpush1.bf16.xpose.msra.mxu0 0
        %897 = vmatprep.subr.bf16.mxu0 0
        %898 = vmatpush1.bf16.xpose.msra.mxu0 0
        %899 = vmatprep.mubr.bf16.mxu0 0
        %900 = vmatmul.mubr.bf16.gmra.mrb[0].mxu0 %v862
        %v901 = vpop.f32.mrb[0].mxu0
        %v902 = vadd.f32 0.0, %v901
        %v903 = vpop.f32.mrb[0].mxu0
        %v904 = vpop.f32.mrb[0].mxu0
        %v905 = vpop.f32.mrb[0].mxu0
        %906 = vdwg.mxu0
        %v907 = vmul.f32 %v902, 0.35355338
        %v908 = vadd.f32 %v907, %v790
        %v909 = vsel %vm738, %v908, -inf
        %910 = vmax.xlane.f32.xlu0 %v909
        %v911 = vpop.xlane.xlu0 %910
        %v912 = vsub.f32 %v908, %v911
        %v913 = vmul.f32 %v912, 1.442695
        %v914 = vpow.pop %v913
        %v915 = vsel %vm738, %v914, 0.0
        %916 = vadd.xlane.f32.xlu0 %v915
        %v917 = vpop.xlane.xlu0 %916
        %v918 = vrcp.pop %v917
        %v919 = vmul.f32 %v914, %v918
        %v920 = vpack.c.bf16 %v919, %v919
        %921 = vrot.lane.b32.xlu0 %v737, 88
        %v922 = vpop.permute.xlu0 %921
        %v924 = vsel %vm738, %v920, 0
        %v927 = vsel %vm811, %v922, 0
        %929 = vmatprep.subr.bf16.mxu0 0
        %930 = vmatpush1.bf16.msra.mxu0 %v927
        %931 = vmatprep.subr.bf16.mxu0 0
        %932 = vmatpush1.bf16.msra.mxu0 0
        %933 = vmatprep.subr.bf16.mxu0 0
        %934 = vmatpush1.bf16.msra.mxu0 0
        %935 = vmatprep.subr.bf16.mxu0 0
        %936 = vmatpush1.bf16.msra.mxu0 0
        %937 = vmatprep.subr.bf16.mxu0 0
        %938 = vmatpush1.bf16.msra.mxu0 0
        %939 = vmatprep.subr.bf16.mxu0 0
        %940 = vmatpush1.bf16.msra.mxu0 0
        %941 = vmatprep.subr.bf16.mxu0 0
        %942 = vmatpush1.bf16.msra.mxu0 0
        %943 = vmatprep.subr.bf16.mxu0 0
        %944 = vmatpush1.bf16.msra.mxu0 0
        %945 = vmatprep.subr.bf16.mxu0 0
        %946 = vmatpush1.bf16.msra.mxu0 0
        %947 = vmatprep.subr.bf16.mxu0 0
        %948 = vmatpush1.bf16.msra.mxu0 0
        %949 = vmatprep.subr.bf16.mxu0 0
        %950 = vmatpush1.bf16.msra.mxu0 0
        %951 = vmatprep.subr.bf16.mxu0 0
        %952 = vmatpush1.bf16.msra.mxu0 0
        %953 = vmatprep.subr.bf16.mxu0 0
        %954 = vmatpush1.bf16.msra.mxu0 0
        %955 = vmatprep.subr.bf16.mxu0 0
        %956 = vmatpush1.bf16.msra.mxu0 0
        %957 = vmatprep.subr.bf16.mxu0 0
        %958 = vmatpush1.bf16.msra.mxu0 0
        %959 = vmatprep.subr.bf16.mxu0 0
        %960 = vmatpush1.bf16.msra.mxu0 0
        %961 = vmatprep.mubr.bf16.mxu0 0
        %962 = vmatmul.mubr.bf16.gmra.mrb[0].mxu0 %v924
        %v963 = vpop.f32.mrb[0].mxu0
        %v964 = vadd.f32 0.0, %v963
        %v965 = vpop.f32.mrb[0].mxu0
        %v966 = vpop.f32.mrb[0].mxu0
        %v967 = vpop.f32.mrb[0].mxu0
        %968 = vdwg.mxu0
        %970 = vrot.lane.b32.xlu0 %v964, 8
        %v971 = vpop.permute.xlu0 %970
        %vm973 = vcmask 130112
        %974 = vst.msk [vmem:[#allocation2] sm:$0xff] %vm973, %v971
        %975 = vrot.lane.b32.xlu0 %v736, 112
        %v976 = vpop.permute.xlu0 %975
        %977 = vrot.lane.b32.xlu0 %v737, 112
        %v978 = vpop.permute.xlu0 %977
        %v980 = vsel %vm738, %v976, 0
        %v983 = vsel %vm738, %v978, 0
        %985 = vmatprep.subr.bf16.mxu0 0
        %986 = vmatpush1.bf16.xpose.msra.mxu0 %v983
        %987 = vmatprep.subr.bf16.mxu0 0
        %988 = vmatpush1.bf16.xpose.msra.mxu0 0
        %989 = vmatprep.subr.bf16.mxu0 0
        %990 = vmatpush1.bf16.xpose.msra.mxu0 0
        %991 = vmatprep.subr.bf16.mxu0 0
        %992 = vmatpush1.bf16.xpose.msra.mxu0 0
        %993 = vmatprep.subr.bf16.mxu0 0
        %994 = vmatpush1.bf16.xpose.msra.mxu0 0
        %995 = vmatprep.subr.bf16.mxu0 0
        %996 = vmatpush1.bf16.xpose.msra.mxu0 0
        %997 = vmatprep.subr.bf16.mxu0 0
        %998 = vmatpush1.bf16.xpose.msra.mxu0 0
        %999 = vmatprep.subr.bf16.mxu0 0
        %1000 = vmatpush1.bf16.xpose.msra.mxu0 0
        %1001 = vmatprep.subr.bf16.mxu0 0
        %1002 = vmatpush1.bf16.xpose.msra.mxu0 0
        %1003 = vmatprep.subr.bf16.mxu0 0
        %1004 = vmatpush1.bf16.xpose.msra.mxu0 0
        %1005 = vmatprep.subr.bf16.mxu0 0
        %1006 = vmatpush1.bf16.xpose.msra.mxu0 0
        %1007 = vmatprep.subr.bf16.mxu0 0
        %1008 = vmatpush1.bf16.xpose.msra.mxu0 0
        %1009 = vmatprep.subr.bf16.mxu0 0
        %1010 = vmatpush1.bf16.xpose.msra.mxu0 0
        %1011 = vmatprep.subr.bf16.mxu0 0
        %1012 = vmatpush1.bf16.xpose.msra.mxu0 0
        %1013 = vmatprep.subr.bf16.mxu0 0
        %1014 = vmatpush1.bf16.xpose.msra.mxu0 0
        %1015 = vmatprep.subr.bf16.mxu0 0
        %1016 = vmatpush1.bf16.xpose.msra.mxu0 0
        %1017 = vmatprep.mubr.bf16.mxu0 0
        %1018 = vmatmul.mubr.bf16.gmra.mrb[0].mxu0 %v980
        %v1019 = vpop.f32.mrb[0].mxu0
        %v1020 = vadd.f32 0.0, %v1019
        %v1021 = vpop.f32.mrb[0].mxu0
        %v1022 = vpop.f32.mrb[0].mxu0
        %v1023 = vpop.f32.mrb[0].mxu0
        %1024 = vdwg.mxu0
        %v1025 = vmul.f32 %v1020, 0.35355338
        %v1026 = vadd.f32 %v1025, %v790
        %v1027 = vsel %vm738, %v1026, -inf
        %1028 = vmax.xlane.f32.xlu0 %v1027
        %v1029 = vpop.xlane.xlu0 %1028
        %v1030 = vsub.f32 %v1026, %v1029
        %v1031 = vmul.f32 %v1030, 1.442695
        %v1032 = vpow.pop %v1031
        %v1033 = vsel %vm738, %v1032, 0.0
        %1034 = vadd.xlane.f32.xlu0 %v1033
        %v1035 = vpop.xlane.xlu0 %1034
        %v1036 = vrcp.pop %v1035
        %v1037 = vmul.f32 %v1032, %v1036
        %v1038 = vpack.c.bf16 %v1037, %v1037
        %1039 = vrot.lane.b32.xlu0 %v737, 80
        %v1040 = vpop.permute.xlu0 %1039
        %v1042 = vsel %vm738, %v1038, 0
        %v1045 = vsel %vm811, %v1040, 0
        %1047 = vmatprep.subr.bf16.mxu0 0
        %1048 = vmatpush1.bf16.msra.mxu0 %v1045
        %1049 = vmatprep.subr.bf16.mxu0 0
        %1050 = vmatpush1.bf16.msra.mxu0 0
        %1051 = vmatprep.subr.bf16.mxu0 0
        %1052 = vmatpush1.bf16.msra.mxu0 0
        %1053 = vmatprep.subr.bf16.mxu0 0
        %1054 = vmatpush1.bf16.msra.mxu0 0
        %1055 = vmatprep.subr.bf16.mxu0 0
        %1056 = vmatpush1.bf16.msra.mxu0 0
        %1057 = vmatprep.subr.bf16.mxu0 0
        %1058 = vmatpush1.bf16.msra.mxu0 0
        %1059 = vmatprep.subr.bf16.mxu0 0
        %1060 = vmatpush1.bf16.msra.mxu0 0
        %1061 = vmatprep.subr.bf16.mxu0 0
        %1062 = vmatpush1.bf16.msra.mxu0 0
        %1063 = vmatprep.subr.bf16.mxu0 0
        %1064 = vmatpush1.bf16.msra.mxu0 0
        %1065 = vmatprep.subr.bf16.mxu0 0
        %1066 = vmatpush1.bf16.msra.mxu0 0
        %1067 = vmatprep.subr.bf16.mxu0 0
        %1068 = vmatpush1.bf16.msra.mxu0 0
        %1069 = vmatprep.subr.bf16.mxu0 0
        %1070 = vmatpush1.bf16.msra.mxu0 0
        %1071 = vmatprep.subr.bf16.mxu0 0
        %1072 = vmatpush1.bf16.msra.mxu0 0
        %1073 = vmatprep.subr.bf16.mxu0 0
        %1074 = vmatpush1.bf16.msra.mxu0 0
        %1075 = vmatprep.subr.bf16.mxu0 0
        %1076 = vmatpush1.bf16.msra.mxu0 0
        %1077 = vmatprep.subr.bf16.mxu0 0
        %1078 = vmatpush1.bf16.msra.mxu0 0
        %1079 = vmatprep.mubr.bf16.mxu0 0
        %1080 = vmatmul.mubr.bf16.gmra.mrb[0].mxu0 %v1042
        %v1081 = vpop.f32.mrb[0].mxu0
        %v1082 = vadd.f32 0.0, %v1081
        %v1083 = vpop.f32.mrb[0].mxu0
        %v1084 = vpop.f32.mrb[0].mxu0
        %v1085 = vpop.f32.mrb[0].mxu0
        %1086 = vdwg.mxu0
        %1088 = vrot.lane.b32.xlu0 %v1082, 16
        %v1089 = vpop.permute.xlu0 %1088
        %vm1091 = vcmask 195712
        %1092 = vst.msk [vmem:[#allocation2] sm:$0xff] %vm1091, %v1089
        %1093 = vrot.lane.b32.xlu0 %v736, 104
        %v1094 = vpop.permute.xlu0 %1093
        %1095 = vrot.lane.b32.xlu0 %v737, 104
        %v1096 = vpop.permute.xlu0 %1095
        %v1098 = vsel %vm738, %v1094, 0
        %v1101 = vsel %vm738, %v1096, 0
        %1103 = vmatprep.subr.bf16.mxu0 0
        %1104 = vmatpush1.bf16.xpose.msra.mxu0 %v1101
        %1105 = vmatprep.subr.bf16.mxu0 0
        %1106 = vmatpush1.bf16.xpose.msra.mxu0 0
        %1107 = vmatprep.subr.bf16.mxu0 0
        %1108 = vmatpush1.bf16.xpose.msra.mxu0 0
        %1109 = vmatprep.subr.bf16.mxu0 0
        %1110 = vmatpush1.bf16.xpose.msra.mxu0 0
        %1111 = vmatprep.subr.bf16.mxu0 0
        %1112 = vmatpush1.bf16.xpose.msra.mxu0 0
        %1113 = vmatprep.subr.bf16.mxu0 0
        %1114 = vmatpush1.bf16.xpose.msra.mxu0 0
        %1115 = vmatprep.subr.bf16.mxu0 0
        %1116 = vmatpush1.bf16.xpose.msra.mxu0 0
        %1117 = vmatprep.subr.bf16.mxu0 0
        %1118 = vmatpush1.bf16.xpose.msra.mxu0 0
        %1119 = vmatprep.subr.bf16.mxu0 0
        %1120 = vmatpush1.bf16.xpose.msra.mxu0 0
        %1121 = vmatprep.subr.bf16.mxu0 0
        %1122 = vmatpush1.bf16.xpose.msra.mxu0 0
        %1123 = vmatprep.subr.bf16.mxu0 0
        %1124 = vmatpush1.bf16.xpose.msra.mxu0 0
        %1125 = vmatprep.subr.bf16.mxu0 0
        %1126 = vmatpush1.bf16.xpose.msra.mxu0 0
        %1127 = vmatprep.subr.bf16.mxu0 0
        %1128 = vmatpush1.bf16.xpose.msra.mxu0 0
        %1129 = vmatprep.subr.bf16.mxu0 0
        %1130 = vmatpush1.bf16.xpose.msra.mxu0 0
        %1131 = vmatprep.subr.bf16.mxu0 0
        %1132 = vmatpush1.bf16.xpose.msra.mxu0 0
        %1133 = vmatprep.subr.bf16.mxu0 0
        %1134 = vmatpush1.bf16.xpose.msra.mxu0 0
        %1135 = vmatprep.mubr.bf16.mxu0 0
        %1136 = vmatmul.mubr.bf16.gmra.mrb[0].mxu0 %v1098
        %v1137 = vpop.f32.mrb[0].mxu0
        %v1138 = vadd.f32 0.0, %v1137
        %v1139 = vpop.f32.mrb[0].mxu0
        %v1140 = vpop.f32.mrb[0].mxu0
        %v1141 = vpop.f32.mrb[0].mxu0
        %1142 = vdwg.mxu0
        %v1143 = vmul.f32 %v1138, 0.35355338
        %v1144 = vadd.f32 %v1143, %v790
        %v1145 = vsel %vm738, %v1144, -inf
        %1146 = vmax.xlane.f32.xlu0 %v1145
        %v1147 = vpop.xlane.xlu0 %1146
        %v1148 = vsub.f32 %v1144, %v1147
        %v1149 = vmul.f32 %v1148, 1.442695
        %v1150 = vpow.pop %v1149
        %v1151 = vsel %vm738, %v1150, 0.0
        %1152 = vadd.xlane.f32.xlu0 %v1151
        %v1153 = vpop.xlane.xlu0 %1152
        %v1154 = vrcp.pop %v1153
        %v1155 = vmul.f32 %v1150, %v1154
        %v1156 = vpack.c.bf16 %v1155, %v1155
        %1157 = vrot.lane.b32.xlu0 %v737, 72
        %v1158 = vpop.permute.xlu0 %1157
        %v1160 = vsel %vm738, %v1156, 0
        %v1163 = vsel %vm811, %v1158, 0
        %1165 = vmatprep.subr.bf16.mxu0 0
        %1166 = vmatpush1.bf16.msra.mxu0 %v1163
        %1167 = vmatprep.subr.bf16.mxu0 0
        %1168 = vmatpush1.bf16.msra.mxu0 0
        %1169 = vmatprep.subr.bf16.mxu0 0
        %1170 = vmatpush1.bf16.msra.mxu0 0
        %1171 = vmatprep.subr.bf16.mxu0 0
        %1172 = vmatpush1.bf16.msra.mxu0 0
        %1173 = vmatprep.subr.bf16.mxu0 0
        %1174 = vmatpush1.bf16.msra.mxu0 0
        %1175 = vmatprep.subr.bf16.mxu0 0
        %1176 = vmatpush1.bf16.msra.mxu0 0
        %1177 = vmatprep.subr.bf16.mxu0 0
        %1178 = vmatpush1.bf16.msra.mxu0 0
        %1179 = vmatprep.subr.bf16.mxu0 0
        %1180 = vmatpush1.bf16.msra.mxu0 0
        %1181 = vmatprep.subr.bf16.mxu0 0
        %1182 = vmatpush1.bf16.msra.mxu0 0
        %1183 = vmatprep.subr.bf16.mxu0 0
        %1184 = vmatpush1.bf16.msra.mxu0 0
        %1185 = vmatprep.subr.bf16.mxu0 0
        %1186 = vmatpush1.bf16.msra.mxu0 0
        %1187 = vmatprep.subr.bf16.mxu0 0
        %1188 = vmatpush1.bf16.msra.mxu0 0
        %1189 = vmatprep.subr.bf16.mxu0 0
        %1190 = vmatpush1.bf16.msra.mxu0 0
        %1191 = vmatprep.subr.bf16.mxu0 0
        %1192 = vmatpush1.bf16.msra.mxu0 0
        %1193 = vmatprep.subr.bf16.mxu0 0
        %1194 = vmatpush1.bf16.msra.mxu0 0
        %1195 = vmatprep.subr.bf16.mxu0 0
        %1196 = vmatpush1.bf16.msra.mxu0 0
        %1197 = vmatprep.mubr.bf16.mxu0 0
        %1198 = vmatmul.mubr.bf16.gmra.mrb[0].mxu0 %v1160
        %v1199 = vpop.f32.mrb[0].mxu0
        %v1200 = vadd.f32 0.0, %v1199
        %v1201 = vpop.f32.mrb[0].mxu0
        %v1202 = vpop.f32.mrb[0].mxu0
        %v1203 = vpop.f32.mrb[0].mxu0
        %1204 = vdwg.mxu0
        %1206 = vrot.lane.b32.xlu0 %v1200, 24
        %v1207 = vpop.permute.xlu0 %1206
        %vm1209 = vcmask 261312
        %1210 = vst.msk [vmem:[#allocation2] sm:$0xff] %vm1209, %v1207
        %v1211 = vld [vmem:[#allocation2] sm:$0xff]
        %v1212 = vpack.c.bf16 %v1211, %v1211
        %v1213 = vld [vmem:[#allocation6] sm:$0xf]
        %v1214 = vld [vmem:[#allocation6 + $0x4] sm:$0xf]
        %v1215 = vld [vmem:[#allocation6 + $0x8] sm:$0xf]
        %v1216 = vld [vmem:[#allocation6 + $0xc] sm:$0xf]
        %v1217 = vld [vmem:[#allocation8] sm:$0x1]
        %v1219 = vlaneseq
        %v1220 = vshrl.u32 %v1219, 7
        %v1221 = vsub.s32 0, %v1220
        %v1222 = vrot.slane %v1217, %v1221
        %v1228 = vunpack.c.l.b16 %v1213
        %v1229 = vunpack.c.l.b16 %v1214
        %v1230 = vunpack.c.l.b16 %v1215
        %v1231 = vunpack.c.l.b16 %v1216
        %v1232 = vpack.c.b16 %v1229, %v1228
        %v1233 = vpack.c.b16 %v1231, %v1230
        %v1237 = vsel %vm640, %v1212, 0
        %1239 = vmatprep.subr.bf16.mxu0 0
        %1240 = vmatpush1.bf16.msra.mxu0 %v1232
        %1241 = vmatprep.subr.bf16.mxu0 0
        %1242 = vmatpush1.bf16.msra.mxu0 %v1233
        %1243 = vmatprep.subr.bf16.mxu0 0
        %1244 = vmatpush1.bf16.msra.mxu0 0
        %1245 = vmatprep.subr.bf16.mxu0 0
        %1246 = vmatpush1.bf16.msra.mxu0 0
        %1247 = vmatprep.subr.bf16.mxu0 0
        %1248 = vmatpush1.bf16.msra.mxu0 0
        %1249 = vmatprep.subr.bf16.mxu0 0
        %1250 = vmatpush1.bf16.msra.mxu0 0
        %1251 = vmatprep.subr.bf16.mxu0 0
        %1252 = vmatpush1.bf16.msra.mxu0 0
        %1253 = vmatprep.subr.bf16.mxu0 0
        %1254 = vmatpush1.bf16.msra.mxu0 0
        %1255 = vmatprep.subr.bf16.mxu0 0
        %1256 = vmatpush1.bf16.msra.mxu0 0
        %1257 = vmatprep.subr.bf16.mxu0 0
        %1258 = vmatpush1.bf16.msra.mxu0 0
        %1259 = vmatprep.subr.bf16.mxu0 0
        %1260 = vmatpush1.bf16.msra.mxu0 0
        %1261 = vmatprep.subr.bf16.mxu0 0
        %1262 = vmatpush1.bf16.msra.mxu0 0
        %1263 = vmatprep.subr.bf16.mxu0 0
        %1264 = vmatpush1.bf16.msra.mxu0 0
        %1265 = vmatprep.subr.bf16.mxu0 0
        %1266 = vmatpush1.bf16.msra.mxu0 0
        %1267 = vmatprep.subr.bf16.mxu0 0
        %1268 = vmatpush1.bf16.msra.mxu0 0
        %1269 = vmatprep.subr.bf16.mxu0 0
        %1270 = vmatpush1.bf16.msra.mxu0 0
        %1271 = vmatprep.mubr.bf16.mxu0 0
        %1272 = vmatmul.mubr.bf16.gmra.mrb[0].mxu0 %v1237
        %v1273 = vpop.f32.mrb[0].mxu0
        %v1274 = vadd.f32 %v1222, %v1273
        %v1275 = vpop.f32.mrb[0].mxu0
        %v1276 = vpop.f32.mrb[0].mxu0
        %v1277 = vpop.f32.mrb[0].mxu0
        %1278 = vdwg.mxu0
        %v1279 = vld [vmem:[#allocation9] sm:$0x1]
        %v1280 = vld [vmem:[#allocation11] sm:$0x1]
        %v1281 = vsel %vm640, %v1274, 0.0
        %1282 = vadd.xlane.f32.xlu0 %v1281
        %v1283 = vpop.xlane.xlu0 %1282
        %v1284 = vrcp.pop 32.0
        %v1285 = vmul.f32 %v1283, %v1284
        %v1286 = vsub.f32 %v1274, %v1285
        %v1287 = vmul.f32 %v1286, %v1286
        %v1288 = vsel %vm640, %v1287, 0.0
        %1289 = vadd.xlane.f32.xlu0 %v1288
        %v1290 = vpop.xlane.xlu0 %1289
        %v1291 = vmul.f32 %v1290, 0.032258064
        %v1292 = vrsqrt.pop %v1291
        %v1293 = vmul.f32 %v1291, %v1292
        %vm1294 = vcmp.eq.f32.partialorder %v1291, inf
        %v1295 = vsel %vm1294, %v1291, %v1293
        %vm1296 = vcmp.eq.f32.partialorder %v1291, 0.0
        %v1297 = vand.u32 %v1291, 2147483648
        %v1298 = vsel %vm1296, %v1297, %v1295
        %v1299 = vadd.f32 %v1298, 1e-06
        %v1300 = vrcp.pop %v1299
        %v1301 = vmul.f32 %v1286, %v1300
        %v1303 = vlaneseq
        %v1304 = vshrl.u32 %v1303, 7
        %v1305 = vsub.s32 0, %v1304
        %v1306 = vrot.slane %v1279, %v1305
        %v1308 = vmul.f32 %v1301, %v1306
        %v1310 = vlaneseq
        %v1311 = vshrl.u32 %v1310, 7
        %v1312 = vsub.s32 0, %v1311
        %v1313 = vrot.slane %v1280, %v1312
        %v1315 = vadd.f32 %v1308, %v1313
        %v1316 = vadd.f32 %v613, %v1315
        %v1317 = vpack.c.bf16 %v1316, %v1316
        %v1318 = vld [vmem:[%s9] sm:$0xf]
        %v1319 = vld [vmem:[%s9 + $0x4] sm:$0xf]
        %v1320 = vld [vmem:[%s9 + $0x8] sm:$0xf]
        %v1321 = vld [vmem:[%s9 + $0xc] sm:$0xf]
        %v1322 = vld [vmem:[%s10] sm:$0x1]
        %v1324 = vlaneseq
        %v1325 = vshrl.u32 %v1324, 7
        %v1326 = vsub.s32 0, %v1325
        %v1327 = vrot.slane %v1322, %v1326
        %v1333 = vunpack.c.l.b16 %v1318
        %v1334 = vunpack.c.l.b16 %v1319
        %v1335 = vunpack.c.l.b16 %v1320
        %v1336 = vunpack.c.l.b16 %v1321
        %v1337 = vpack.c.b16 %v1334, %v1333
        %v1338 = vpack.c.b16 %v1336, %v1335
        %v1342 = vsel %vm640, %v1317, 0
        %1344 = vmatprep.subr.bf16.mxu0 0
        %1345 = vmatpush1.bf16.msra.mxu0 %v1337
        %1346 = vmatprep.subr.bf16.mxu0 0
        %1347 = vmatpush1.bf16.msra.mxu0 %v1338
        %1348 = vmatprep.subr.bf16.mxu0 0
        %1349 = vmatpush1.bf16.msra.mxu0 0
        %1350 = vmatprep.subr.bf16.mxu0 0
        %1351 = vmatpush1.bf16.msra.mxu0 0
        %1352 = vmatprep.subr.bf16.mxu0 0
        %1353 = vmatpush1.bf16.msra.mxu0 0
        %1354 = vmatprep.subr.bf16.mxu0 0
        %1355 = vmatpush1.bf16.msra.mxu0 0
        %1356 = vmatprep.subr.bf16.mxu0 0
        %1357 = vmatpush1.bf16.msra.mxu0 0
        %1358 = vmatprep.subr.bf16.mxu0 0
        %1359 = vmatpush1.bf16.msra.mxu0 0
        %1360 = vmatprep.subr.bf16.mxu0 0
        %1361 = vmatpush1.bf16.msra.mxu0 0
        %1362 = vmatprep.subr.bf16.mxu0 0
        %1363 = vmatpush1.bf16.msra.mxu0 0
        %1364 = vmatprep.subr.bf16.mxu0 0
        %1365 = vmatpush1.bf16.msra.mxu0 0
        %1366 = vmatprep.subr.bf16.mxu0 0
        %1367 = vmatpush1.bf16.msra.mxu0 0
        %1368 = vmatprep.subr.bf16.mxu0 0
        %1369 = vmatpush1.bf16.msra.mxu0 0
        %1370 = vmatprep.subr.bf16.mxu0 0
        %1371 = vmatpush1.bf16.msra.mxu0 0
        %1372 = vmatprep.subr.bf16.mxu0 0
        %1373 = vmatpush1.bf16.msra.mxu0 0
        %1374 = vmatprep.subr.bf16.mxu0 0
        %1375 = vmatpush1.bf16.msra.mxu0 0
        %1376 = vmatprep.mubr.bf16.mxu0 0
        %1377 = vmatmul.mubr.bf16.gmra.mrb[0].mxu0 %v1342
        %v1378 = vpop.f32.mrb[0].mxu0
        %v1379 = vadd.f32 %v1327, %v1378
        %v1380 = vpop.f32.mrb[0].mxu0
        %v1381 = vpop.f32.mrb[0].mxu0
        %v1382 = vpop.f32.mrb[0].mxu0
        %1383 = vdwg.mxu0
        %v1384 = vmax.f32 %v1379, 0.0
        %v1385 = vpack.c.bf16 %v1384, %v1384
        %v1386 = vld [vmem:[%s11] sm:$0xf]
        %v1387 = vld [vmem:[%s11 + $0x4] sm:$0xf]
        %v1388 = vld [vmem:[%s11 + $0x8] sm:$0xf]
        %v1389 = vld [vmem:[%s11 + $0xc] sm:$0xf]
        %v1390 = vld [vmem:[%s11 + $0x10] sm:$0xf]
        %v1391 = vld [vmem:[%s11 + $0x14] sm:$0xf]
        %v1392 = vld [vmem:[%s11 + $0x18] sm:$0xf]
        %v1393 = vld [vmem:[%s11 + $0x1c] sm:$0xf]
        %v1394 = vld [vmem:[%s12] sm:$0x1]
        %v1396 = vlaneseq
        %v1397 = vshrl.u32 %v1396, 7
        %v1398 = vsub.s32 0, %v1397
        %v1399 = vrot.slane %v1394, %v1398
        %v1409 = vunpack.c.l.b16 %v1386
        %v1410 = vunpack.c.l.b16 %v1387
        %v1411 = vunpack.c.l.b16 %v1388
        %v1412 = vunpack.c.l.b16 %v1389
        %v1413 = vunpack.c.l.b16 %v1390
        %v1414 = vunpack.c.l.b16 %v1391
        %v1415 = vunpack.c.l.b16 %v1392
        %v1416 = vunpack.c.l.b16 %v1393
        %v1417 = vpack.c.b16 %v1410, %v1409
        %v1418 = vpack.c.b16 %v1412, %v1411
        %v1419 = vpack.c.b16 %v1414, %v1413
        %v1420 = vpack.c.b16 %v1416, %v1415
        %vm1425 = vcmask 523264
        %v1427 = vsel %vm1425, %v1385, 0
        %1429 = vmatprep.subr.bf16.mxu0 0
        %1430 = vmatpush1.bf16.msra.mxu0 %v1417
        %1431 = vmatprep.subr.bf16.mxu0 0
        %1432 = vmatpush1.bf16.msra.mxu0 %v1418
        %1433 = vmatprep.subr.bf16.mxu0 0
        %1434 = vmatpush1.bf16.msra.mxu0 %v1419
        %1435 = vmatprep.subr.bf16.mxu0 0
        %1436 = vmatpush1.bf16.msra.mxu0 %v1420
        %1437 = vmatprep.subr.bf16.mxu0 0
        %1438 = vmatpush1.bf16.msra.mxu0 0
        %1439 = vmatprep.subr.bf16.mxu0 0
        %1440 = vmatpush1.bf16.msra.mxu0 0
        %1441 = vmatprep.subr.bf16.mxu0 0
        %1442 = vmatpush1.bf16.msra.mxu0 0
        %1443 = vmatprep.subr.bf16.mxu0 0
        %1444 = vmatpush1.bf16.msra.mxu0 0
        %1445 = vmatprep.subr.bf16.mxu0 0
        %1446 = vmatpush1.bf16.msra.mxu0 0
        %1447 = vmatprep.subr.bf16.mxu0 0
        %1448 = vmatpush1.bf16.msra.mxu0 0
        %1449 = vmatprep.subr.bf16.mxu0 0
        %1450 = vmatpush1.bf16.msra.mxu0 0
        %1451 = vmatprep.subr.bf16.mxu0 0
        %1452 = vmatpush1.bf16.msra.mxu0 0
        %1453 = vmatprep.subr.bf16.mxu0 0
        %1454 = vmatpush1.bf16.msra.mxu0 0
        %1455 = vmatprep.subr.bf16.mxu0 0
        %1456 = vmatpush1.bf16.msra.mxu0 0
        %1457 = vmatprep.subr.bf16.mxu0 0
        %1458 = vmatpush1.bf16.msra.mxu0 0
        %1459 = vmatprep.subr.bf16.mxu0 0
        %1460 = vmatpush1.bf16.msra.mxu0 0
        %1461 = vmatprep.mubr.bf16.mxu0 0
        %1462 = vmatmul.mubr.bf16.gmra.mrb[0].mxu0 %v1427
        %v1463 = vpop.f32.mrb[0].mxu0
        %v1464 = vadd.f32 %v1399, %v1463
        %v1465 = vpop.f32.mrb[0].mxu0
        %v1466 = vpop.f32.mrb[0].mxu0
        %v1467 = vpop.f32.mrb[0].mxu0
        %1468 = vdwg.mxu0
        %v1469 = vld [vmem:[%s13] sm:$0x1]
        %v1470 = vld [vmem:[%s14] sm:$0x1]
        %v1471 = vsel %vm640, %v1464, 0.0
        %1472 = vadd.xlane.f32.xlu0 %v1471
        %v1473 = vpop.xlane.xlu0 %1472
        %v1474 = vmul.f32 %v1473, %v1284
        %v1475 = vsub.f32 %v1464, %v1474
        %v1476 = vmul.f32 %v1475, %v1475
        %v1477 = vsel %vm640, %v1476, 0.0
        %1478 = vadd.xlane.f32.xlu0 %v1477
        %v1479 = vpop.xlane.xlu0 %1478
        %v1480 = vmul.f32 %v1479, 0.032258064
        %v1481 = vrsqrt.pop %v1480
        %v1482 = vmul.f32 %v1480, %v1481
        %vm1483 = vcmp.eq.f32.partialorder %v1480, inf
        %v1484 = vsel %vm1483, %v1480, %v1482
        %vm1485 = vcmp.eq.f32.partialorder %v1480, 0.0
        %v1486 = vand.u32 %v1480, 2147483648
        %v1487 = vsel %vm1485, %v1486, %v1484
        %v1488 = vadd.f32 %v1487, 1e-06
        %v1489 = vrcp.pop %v1488
        %v1490 = vmul.f32 %v1475, %v1489
        %v1492 = vlaneseq
        %v1493 = vshrl.u32 %v1492, 7
        %v1494 = vsub.s32 0, %v1493
        %v1495 = vrot.slane %v1469, %v1494
        %v1497 = vmul.f32 %v1490, %v1495
        %v1499 = vlaneseq
        %v1500 = vshrl.u32 %v1499, 7
        %v1501 = vsub.s32 0, %v1500
        %v1502 = vrot.slane %v1470, %v1501
        %v1504 = vadd.f32 %v1497, %v1502
        %v1505 = vadd.f32 %v1316, %v1504
        %1506 = vst.msk [vmem:[%s596] sm:$0xff] %vm640, %v1505
        %s1507 = sand.u32 %s386, 1
        %s1508 = scalar_lea.sflag [#allocation5], %s1507
        %s1509 = sand.u32 %s386, 1
        %s1510 = smul.addr %s1509, 8
        %s1511 = scalar_lea.vmem [#allocation12], %s1510
        // Predicated region
        $region101: #{tpu_custom_call.1} parent=79 // pred_check
          %p1512 = pneg %p396
        $region102: #{tpu_custom_call.1} parent=79 // pred_check_branch
          %1514 = sbr.rel (%p1512) target = $region104
        $region103: #{tpu_custom_call.1} parent=79 // pred_region
          %s1516 = ssub.s32 128, 128
          %1517 = vsyncadd %s1508, %s1516
          %s1518 = sadd.s32 %s37, %s36
          %s1519 = smul.addr %s1518, 128
          %s1520 = scalar_lea.hbm %s15, %s1519
          %s1522 = sshll.u32 %s1511, 4
          %s1523 = int_to_ptr.vmem [resolvable:$true] %s1522
          %1525 = dma.vmem_to_hbm [thread:$0]  %s1523, 128, %s1520, %s1508
        $region104: #{tpu_custom_call.1} parent=79 // pred_fallthru
          _
      $region80: #{tpu_custom_call.1} parent=5 // pred_fallthru
        _
      %p1526 = scmp.le.s32.totalorder 2, %s27
      // Predicated region
      $region105: #{tpu_custom_call.1} parent=5 // pred_check
        %p1527 = pneg %p1526
      $region106: #{tpu_custom_call.1} parent=5 // pred_check_branch
        %1529 = sbr.rel (%p1527) target = $region108
      $region107: #{tpu_custom_call.1} parent=5 // pred_region
        %s1530 = ssub.s32 %s27, 2
        // Predicated region
        $region109: #{tpu_custom_call.1} parent=107 // pred_check
          %p1531 = pneg %p402
        $region110: #{tpu_custom_call.1} parent=107 // pred_check_branch
          %1533 = sbr.rel (%p1531) target = $region112
        $region111: #{tpu_custom_call.1} parent=107 // pred_region
          %s1534 = sand.u32 %s387, 1
          %s1535 = scalar_lea.sflag [#allocation5], %s1534
          %s1536 = sand.u32 %s387, 1
          %s1537 = smul.addr %s1536, 8
          %s1538 = scalar_lea.vmem [#allocation12], %s1537
          %1539 = dma.done %s1535, 128
        $region112: #{tpu_custom_call.1} parent=107 // pred_fallthru
          _
      $region108: #{tpu_custom_call.1} parent=5 // pred_fallthru
        _
    $region6: #{tpu_custom_call.1} parent=1 // loop_footer
      %s31 = sadd.s32 1, %s27
    $region7: #{tpu_custom_call.1} parent=1 // loop_footer_branch
      %26 = sbr.rel target = $region3
    $region8: #{tpu_custom_call.1} parent=1 // loop_exit
      _
    %1540 = vsyncpa [#allocation4], 1
    %s1541 = scalar_lea.sflag [#allocation4], 1
    %1542 = vsyncpa %s1541, 1
    %1543 = vsyncpa [#allocation7], 1
    %1544 = vsyncpa [#allocation10], 1
    %1545 = vsyncpa [#allocation5], 1
    %s1546 = scalar_lea.sflag [#allocation5], 1
    %1547 = vsyncpa %s1546, 1

</llo_original>
